<compile_context>
chip_gen: v6e
topology: v6e:2x2x1
jax: 0.10.0
libtpu: 0.0.40
codegen_flags: <defaults>
</compile_context>

<pallas_src>
import jax
import jax.numpy as jnp
from jax import lax
from jax.experimental import pallas as pl
from jax.experimental.pallas import tpu as pltpu


def dfmodel_kernel(z_ref, x_ref, a_ref,
                   w_sd_ref, b_sd_ref, w_ih1_ref, w_gi_ref, b_gi_ref,
                   xpred_ref, out_ref, zt_ref,
                   h_s):
    bB, tcH = z_ref.shape          # (block_b, chunk_t*H)
    tc = a_ref.shape[0]            # chunk_t
    H = tcH // tc

    # Fresh recurrent state at the first time-chunk of every batch block.
    @pl.when(pl.program_id(1) == 0)
    def _init():
        h_s[...] = jnp.zeros_like(h_s)

    # Small loop-invariant weights kept as values (H=32).
    w_sd = w_sd_ref[...]           # (5H, 5H) bf16  block-diag fused weight
    w_ih1 = w_ih1_ref[...]         # (H, H)   bf16
    w_gi = w_gi_ref[...]           # (H, 3H)  bf16  [W_ir | W_iz | W_in]
    # Pre-broadcast biases once per chunk (JAX does not CSE broadcasts in the
    # unrolled loop).
    b_sd = jnp.broadcast_to(b_sd_ref[...], (bB, 5 * H))   # f32
    b_gi = jnp.broadcast_to(b_gi_ref[...], (bB, 3 * H))   # f32

    z_blk = z_ref[...]             # (bB, tc*H) f32
    x_blk = x_ref[...]             # (bB, tc*H) f32

    # x0-prediction coefficients for the whole chunk (EUP, off the serial path).
    a_blk = a_ref[...]                                  # (tc, bB, 1) f32
    c1 = jnp.sqrt(jnp.maximum(1.0 - a_blk, 1e-8))       # sqrt(1 - alpha_bar)
    c2 = lax.rsqrt(jnp.maximum(a_blk, 1e-8))            # 1 / sqrt(alpha_bar)

    # ---- serial recurrence over the chunk (fully unrolled, static indices) ----
    h_cat = h_s[...]               # (bB, 3H) f32 = [h0 | h1 | hg]
    outs, zts, xps = [], [], []
    for t in range(tc):
        zt_in = z_blk[:, t * H:(t + 1) * H]             # (bB, H) f32
        xt_in = x_blk[:, t * H:(t + 1) * H]             # (bB, H) f32

        # One fused block-diagonal matmul:
        #   cols [0:H]    = h0@w_hh0 + z_t@w_ih0[:H] + x_t@w_ih0[H:] + b0
        #   cols [H:2H]   = h1@w_hh1 + b1
        #   cols [2H:5H]  = hg@[w_hr|w_hz|w_hn] + [0|0|b_hn]
        lhs = jnp.concatenate([h_cat, zt_in, xt_in], axis=-1).astype(jnp.bfloat16)
        sd = jnp.dot(lhs, w_sd, preferred_element_type=jnp.float32) + b_sd

        h0n = jnp.tanh(sd[:, :H])
        h1n = jnp.tanh(jnp.dot(h0n.astype(jnp.bfloat16), w_ih1,
                               preferred_element_type=jnp.float32)
                       + sd[:, H:2 * H])
        gi = jnp.dot(h1n.astype(jnp.bfloat16), w_gi,
                     preferred_element_type=jnp.float32) + b_gi     # (bB, 3H)

        r = jax.nn.sigmoid(gi[:, :H] + sd[:, 2 * H:3 * H])
        zg = jax.nn.sigmoid(gi[:, H:2 * H] + sd[:, 3 * H:4 * H])
        n = jnp.tanh(gi[:, 2 * H:3 * H] + r * sd[:, 4 * H:5 * H])
        hg = h_cat[:, 2 * H:3 * H]
        hgn = (1.0 - zg) * n + zg * hg

        xps.append((xt_in - c1[t] * h1n) * c2[t])       # off the critical path
        outs.append(h1n)
        zts.append(hgn)
        h_cat = jnp.concatenate([h0n, h1n, hgn], axis=-1)

    h_s[...] = h_cat

    # Single lane-dense store per output per chunk.
    out_ref[...] = jnp.concatenate(outs, axis=-1)
    zt_ref[...] = jnp.concatenate(zts, axis=-1)
    xpred_ref[...] = jnp.concatenate(xps, axis=-1)


def _pick_chunk(T, H, target=32):
    """Largest divisor of T <= target with chunk*H a multiple of 128 (lane-dense)."""
    best = None
    for c in range(1, T + 1):
        if T % c:
            continue
        if (c * H) % 128 and c != T:
            continue
        if c <= target:
            best = c
    return best if best is not None else T


def dfmodel_forward(params, z_t_prev, x_t_noisy, k, alpha_bar, *,
                    chunk_t=None, block_b=None):
    """Inputs are batch_first (B, T, H), matching the PyTorch module."""
    B, T, H = z_t_prev.shape
    if chunk_t is None:
        chunk_t = _pick_chunk(T, H)
    assert T % chunk_t == 0 and ((chunk_t * H) % 128 == 0 or chunk_t == T), \
        "chunk_t must divide T and keep the output slab lane-dense"
    if block_b is None:
        # v7x: split the batch across the two TensorCores when it stays a
        # multiple of 8; single block otherwise (v5e/v6e have 1 TC).
        block_b = B // 2 if (B % 16 == 0) else B
    assert B % block_b == 0 and (block_b == B or block_b % 8 == 0)

    f32, bf16 = jnp.float32, jnp.bfloat16

    # Batch-first, lane-dense presentation: (B,T,H) -> (B, T*H) is a row-major
    # preserving reshape (no HBM transpose).
    z2d = z_t_prev.astype(f32).reshape(B, T * H)
    x2d = x_t_noisy.astype(f32).reshape(B, T * H)

    # torch.gather(alpha_bar, 0, k.view(-1)).view(B, T, 1): tiny, time-major
    # (T, B, 1) for clean per-step sublane indexing inside the kernel.
    alpha_t = jnp.take(alpha_bar, k.reshape(-1)).reshape(B, T).astype(f32)
    a_tm = alpha_t.T[:, :, None]                        # (T, B, 1)

    # ---- fused weight packing (block-diagonal step-start matmul) ----
    zz = jnp.zeros((H, H), f32)
    zz3 = jnp.zeros((H, 3 * H), f32)
    w_gh = jnp.concatenate([params['w_hr'], params['w_hz'], params['w_hn']], axis=1)
    w0a, w0b = params['w_ih0'][:H], params['w_ih0'][H:]
    w_sd = jnp.concatenate([
        jnp.concatenate([params['w_hh0'], zz, zz3], axis=1),   # h0 rows
        jnp.concatenate([zz, params['w_hh1'], zz3], axis=1),   # h1 rows
        jnp.concatenate([zz, zz, w_gh], axis=1),               # hg rows
        jnp.concatenate([w0a, zz, zz3], axis=1),               # z_t rows
        jnp.concatenate([w0b, zz, zz3], axis=1),               # x_t rows
    ], axis=0).astype(bf16)                                    # (5H, 5H)
    zb = jnp.zeros((1, H), f32)
    b_sd = jnp.concatenate([params['b0'], params['b1'], zb, zb, params['b_hn']],
                           axis=1)                             # (1, 5H) f32
    w_ih1 = params['w_ih1'].astype(bf16)
    w_gi = jnp.concatenate([params['w_ir'], params['w_iz'], params['w_in']],
                           axis=1).astype(bf16)                # (H, 3H)
    b_gi = jnp.concatenate([params['b_r'], params['b_z'], params['b_in']], axis=1)

    ins = [z2d, x2d, a_tm, w_sd, b_sd, w_ih1, w_gi, b_gi]

    io_spec = pl.BlockSpec((block_b, chunk_t * H), lambda b, t: (b, t))
    a_spec = pl.BlockSpec((chunk_t, block_b, 1), lambda b, t: (t, b, 0))

    def const_spec(arr):
        nd = arr.ndim
        return pl.BlockSpec(arr.shape, lambda b, t: (0,) * nd)

    in_specs = [io_spec, io_spec, a_spec] + [const_spec(v) for v in ins[3:]]
    out_specs = (io_spec, io_spec, io_spec)
    # TODO(synk): bf16 output dtype would halve writeback on v5e if acceptable.
    out_shapes = tuple(jax.ShapeDtypeStruct((B, T * H), f32) for _ in range(3))

    grid = (B // block_b, T // chunk_t)

    # Explicit VMEM budget (double-buffered IO + weights + state scratch).
    blk_io = block_b * chunk_t * H * 4
    w_bytes = (w_sd.size + w_ih1.size + w_gi.size) * 2 + (b_sd.size + b_gi.size) * 4
    est = 2 * (5 * blk_io + chunk_t * block_b * 4 + w_bytes) + block_b * 3 * H * 4
    vmem_limit = int(min(48 << 20, max(8 << 20, 4 * est)))

    xpred, out, zt = pl.pallas_call(
        dfmodel_kernel,
        out_shape=out_shapes,
        grid_spec=pltpu.PrefetchScalarGridSpec(
            num_scalar_prefetch=0,
            grid=grid,
            in_specs=in_specs,
            out_specs=out_specs,
            scratch_shapes=[pltpu.VMEM((block_b, 3 * H), jnp.float32)]),
        compiler_params=pltpu.CompilerParams(
            dimension_semantics=("parallel", "arbitrary"),
            vmem_limit_bytes=vmem_limit),
    )(*ins)

    rs = lambda v: v.reshape(B, T, H)      # free (row-major preserving)
    return rs(xpred), rs(out), rs(zt)


def init_params(key, hidden_dim):
    """Deterministic synthetic init mimicking PyTorch RNN/GRU uniform init.

    Weights are stored transposed relative to PyTorch (kernel does x @ W).
    PyTorch's b_ih + b_hh are pre-summed where the math allows it.
    """
    H = hidden_dim
    bound = 1.0 / (H ** 0.5)
    keys = jax.random.split(key, 20)
    u = lambda kk, shape: jax.random.uniform(
        kk, shape, jnp.float32, minval=-bound, maxval=bound)
    return dict(
        # nn.RNN layer 0: input 2H -> H
        w_ih0=u(keys[0], (2 * H, H)),
        w_hh0=u(keys[1], (H, H)),
        b0=u(keys[2], (1, H)) + u(keys[3], (1, H)),
        # nn.RNN layer 1: H -> H
        w_ih1=u(keys[4], (H, H)),
        w_hh1=u(keys[5], (H, H)),
        b1=u(keys[6], (1, H)) + u(keys[7], (1, H)),
        # nn.GRU: H -> H (per-gate matrices: r, z, n)
        w_ir=u(keys[8], (H, H)), w_iz=u(keys[9], (H, H)), w_in=u(keys[10], (H, H)),
        w_hr=u(keys[11], (H, H)), w_hz=u(keys[12], (H, H)), w_hn=u(keys[13], (H, H)),
        b_r=u(keys[14], (1, H)) + u(keys[15], (1, H)),
        b_z=u(keys[16], (1, H)) + u(keys[17], (1, H)),
        b_in=u(keys[18], (1, H)),
        b_hn=u(keys[19], (1, H)),
    )


def reference_forward(params, z, x, k, alpha_bar, matmul_dtype=jnp.float32):
    """Pure-JAX reference reproducing DFModel.forward semantics.

    matmul_dtype=bfloat16 mirrors the kernel's mixed precision (bf16 MXU
    operands, f32 accumulation) so the kernel logic can be checked tightly.
    """
    B, T, H = z.shape
    inp = jnp.concatenate([z, x], axis=-1).transpose(1, 0, 2)   # (T, B, 2H)
    dot = lambda a, b: jnp.dot(a.astype(matmul_dtype), b.astype(matmul_dtype),
                               preferred_element_type=jnp.float32)

    def step(carry, xt):
        h0, h1, hg = carry
        h0n = jnp.tanh(dot(xt, params['w_ih0']) + dot(h0, params['w_hh0'])
                       + params['b0'])
        h1n = jnp.tanh(dot(h0n, params['w_ih1']) + dot(h1, params['w_hh1'])
                       + params['b1'])
        r = jax.nn.sigmoid(dot(h1n, params['w_ir']) + dot(hg, params['w_hr'])
                           + params['b_r'])
        zg = jax.nn.sigmoid(dot(h1n, params['w_iz']) + dot(hg, params['w_hz'])
                            + params['b_z'])
        n = jnp.tanh(dot(h1n, params['w_in']) + params['b_in']
                     + r * (dot(hg, params['w_hn']) + params['b_hn']))
        hgn = (1.0 - zg) * n + zg * hg
        return (h0n, h1n, hgn), (h1n, hgn)

    h0 = jnp.zeros((B, H), jnp.float32)
    _, (outs, zts) = lax.scan(step, (h0, h0, h0), inp)
    output = outs.transpose(1, 0, 2)
    zt_updated = zts.transpose(1, 0, 2)

    alpha_t = jnp.take(alpha_bar, k.reshape(-1)).reshape(B, T, 1)
    sqrt_a = jnp.sqrt(jnp.maximum(alpha_t, 1e-8))
    sqrt_1ma = jnp.sqrt(jnp.maximum(1.0 - alpha_t, 1e-8))
    x_t_pred = (x - sqrt_1ma * output) / sqrt_a
    return x_t_pred, output, zt_updated


if __name__ == "__main__":
    B, T, H = 2, 8, 32          # batch, seq length, hidden_dim
    num_diffusion_steps = 50

    key = jax.random.PRNGKey(0)
    kp, kz, kx, kk = jax.random.split(key, 4)

    params = init_params(kp, H)
    z_t_prev = jax.random.normal(kz, (B, T, H), jnp.float32)
    x_t_noisy = jax.random.normal(kx, (B, T, H), jnp.float32)
    k = jax.random.randint(kk, (B, T), 0, num_diffusion_steps)
    betas = jnp.linspace(1e-4, 0.02, num_diffusion_steps, dtype=jnp.float32)
    alpha_bar = jnp.cumprod(1.0 - betas)

    # chunk_t=4 -> 2 time-chunks: exercises the streamed grid + scratch carry
    # and keeps the output slab lane-dense (chunk_t*H = 128).
    outs = dfmodel_forward(params, z_t_prev, x_t_noisy, k, alpha_bar, chunk_t=4)
    outs = jax.block_until_ready(outs)

    # 1) Logic check vs. a reference using the same mixed precision as the
    #    kernel (bf16 MXU operands, f32 accumulation); residual differences
    #    are only f32 summation order from the fused block-diagonal matmul.
    refs_bf16 = reference_forward(params, z_t_prev, x_t_noisy, k, alpha_bar,
                                  matmul_dtype=jnp.bfloat16)
    for got, want in zip(outs, refs_bf16):
        assert got.shape == want.shape
        assert jnp.allclose(got, want, atol=5e-3, rtol=5e-3), \
            float(jnp.max(jnp.abs(got - want)))

    # 2) Precision sanity vs. the full-f32 PyTorch-equivalent reference
    #    (loose tolerance accounts for bf16 matmul operands in the kernel).
    refs_f32 = reference_forward(params, z_t_prev, x_t_noisy, k, alpha_bar,
                                 matmul_dtype=jnp.float32)
    for got, want in zip(outs, refs_f32):
        assert got.shape == want.shape
        assert jnp.allclose(got, want, atol=1e-1, rtol=1e-1), \
            float(jnp.max(jnp.abs(got - want)))

    print("KERNEL_OK")
</pallas_src>

<mosaic_0001>
module attributes {stable_mosaic.version = 11 : i64} {
  func.func @dfmodel_kernel(%arg0: i32, %arg1: i32, %arg2: memref<2x128xf32, #tpu.memory_space<vmem>>, %arg3: memref<2x128xf32, #tpu.memory_space<vmem>>, %arg4: memref<4x2x1xf32, #tpu.memory_space<vmem>>, %arg5: memref<160x160xbf16, #tpu.memory_space<vmem>>, %arg6: memref<1x160xf32, #tpu.memory_space<vmem>>, %arg7: memref<32x32xbf16, #tpu.memory_space<vmem>>, %arg8: memref<32x96xbf16, #tpu.memory_space<vmem>>, %arg9: memref<1x96xf32, #tpu.memory_space<vmem>>, %arg10: memref<2x128xf32, #tpu.memory_space<vmem>>, %arg11: memref<2x128xf32, #tpu.memory_space<vmem>>, %arg12: memref<2x128xf32, #tpu.memory_space<vmem>>, %arg13: memref<2x96xf32, #tpu.memory_space<vmem>>) attributes {dimension_semantics = [#tpu.dimension_semantics<parallel>, #tpu.dimension_semantics<arbitrary>], iteration_bounds = array<i64: 1, 2>, scalar_prefetch = 0 : i64, scratch_operands = 1 : i64, tpu.core_type = #tpu.core_type<tc>, window_params = [{transform_indices = @transform_0, window_bounds = array<i64: 2, 128>}, {transform_indices = @transform_1, window_bounds = array<i64: 2, 128>}, {transform_indices = @transform_2, window_bounds = array<i64: 4, 2, 1>}, {pipeline_mode = #tpu.pipeline_mode<synchronous>, transform_indices = @transform_3, window_bounds = array<i64: 160, 160>}, {pipeline_mode = #tpu.pipeline_mode<synchronous>, transform_indices = @transform_4, window_bounds = array<i64: 1, 160>}, {pipeline_mode = #tpu.pipeline_mode<synchronous>, transform_indices = @transform_5, window_bounds = array<i64: 32, 32>}, {pipeline_mode = #tpu.pipeline_mode<synchronous>, transform_indices = @transform_6, window_bounds = array<i64: 32, 96>}, {pipeline_mode = #tpu.pipeline_mode<synchronous>, transform_indices = @transform_7, window_bounds = array<i64: 1, 96>}, {transform_indices = @transform_8, window_bounds = array<i64: 2, 128>}, {transform_indices = @transform_9, window_bounds = array<i64: 2, 128>}, {transform_indices = @transform_10, window_bounds = array<i64: 2, 128>}]} {
    %c0_i32 = arith.constant 0 : i32
    %0 = arith.cmpi eq, %arg1, %c0_i32 : i32
    %1 = arith.extui %0 : i1 to i32
    %c0_i32_0 = arith.constant 0 : i32
    %2 = arith.cmpi ne, %1, %c0_i32_0 : i32
    scf.if %2 {
      %cst_53 = arith.constant 0.000000e+00 : f32
      %243 = vector.broadcast %cst_53 : f32 to vector<2x96xf32>
      %c0_54 = arith.constant 0 : index
      %c0_55 = arith.constant 0 : index
      %244 = vector.load %arg13[%c0_54, %c0_55] : memref<2x96xf32, #tpu.memory_space<vmem>>, vector<2x96xf32>
      tpu.vector_store %arg13[%c0_54, %c0_55], %243 {strides = array<i32>} : memref<2x96xf32, #tpu.memory_space<vmem>>, vector<2x96xf32>,
    } else {
    }
    %c0 = arith.constant 0 : index
    %c0_1 = arith.constant 0 : index
    %3 = vector.load %arg5[%c0, %c0_1] : memref<160x160xbf16, #tpu.memory_space<vmem>>, vector<160x160xbf16>
    %c0_2 = arith.constant 0 : index
    %c0_3 = arith.constant 0 : index
    %4 = vector.load %arg7[%c0_2, %c0_3] : memref<32x32xbf16, #tpu.memory_space<vmem>>, vector<32x32xbf16>
    %c0_4 = arith.constant 0 : index
    %c0_5 = arith.constant 0 : index
    %5 = vector.load %arg8[%c0_4, %c0_5] : memref<32x96xbf16, #tpu.memory_space<vmem>>, vector<32x96xbf16>
    %c0_6 = arith.constant 0 : index
    %c0_7 = arith.constant 0 : index
    %6 = vector.load %arg6[%c0_6, %c0_7] : memref<1x160xf32, #tpu.memory_space<vmem>>, vector<1x160xf32>
    %7 = vector.shape_cast %6 : vector<1x160xf32> to vector<1x160xf32>
    %8 = vector.broadcast %7 : vector<1x160xf32> to vector<2x160xf32>
    %c0_8 = arith.constant 0 : index
    %c0_9 = arith.constant 0 : index
    %9 = vector.load %arg9[%c0_8, %c0_9] : memref<1x96xf32, #tpu.memory_space<vmem>>, vector<1x96xf32>
    %10 = vector.shape_cast %9 : vector<1x96xf32> to vector<1x96xf32>
    %11 = vector.broadcast %10 : vector<1x96xf32> to vector<2x96xf32>
    %c0_10 = arith.constant 0 : index
    %c0_11 = arith.constant 0 : index
    %12 = vector.load %arg2[%c0_10, %c0_11] : memref<2x128xf32, #tpu.memory_space<vmem>>, vector<2x128xf32>
    %c0_12 = arith.constant 0 : index
    %c0_13 = arith.constant 0 : index
    %13 = vector.load %arg3[%c0_12, %c0_13] : memref<2x128xf32, #tpu.memory_space<vmem>>, vector<2x128xf32>
    %c0_14 = arith.constant 0 : index
    %c0_15 = arith.constant 0 : index
    %c0_16 = arith.constant 0 : index
    %14 = vector.load %arg4[%c0_14, %c0_15, %c0_16] : memref<4x2x1xf32, #tpu.memory_space<vmem>>, vector<4x2x1xf32>
    %cst = arith.constant 1.000000e+00 : f32
    %15 = vector.broadcast %cst : f32 to vector<4x2x1xf32>
    %16 = arith.subf %15, %14 : vector<4x2x1xf32>
    %cst_17 = arith.constant 9.99999993E-9 : f32
    %17 = vector.broadcast %cst_17 : f32 to vector<4x2x1xf32>
    %18 = arith.maximumf %16, %17 : vector<4x2x1xf32>
    %19 = math.sqrt %18 : vector<4x2x1xf32>
    %cst_18 = arith.constant 9.99999993E-9 : f32
    %20 = vector.broadcast %cst_18 : f32 to vector<4x2x1xf32>
    %21 = arith.maximumf %14, %20 : vector<4x2x1xf32>
    %22 = math.rsqrt %21 : vector<4x2x1xf32>
    %c0_19 = arith.constant 0 : index
    %c0_20 = arith.constant 0 : index
    %23 = vector.load %arg13[%c0_19, %c0_20] : memref<2x96xf32, #tpu.memory_space<vmem>>, vector<2x96xf32>
    %24 = vector.extract_strided_slice %12 {offsets = [0, 0], sizes = [2, 32], strides = [1, 1]} : vector<2x128xf32> to vector<2x32xf32>
    %25 = vector.extract_strided_slice %13 {offsets = [0, 0], sizes = [2, 32], strides = [1, 1]} : vector<2x128xf32> to vector<2x32xf32>
    %26 = tpu.concatenate %23, %24, %25 in 1 : vector<2x96xf32>, vector<2x32xf32>, vector<2x32xf32> -> vector<2x160xf32>
    %27 = arith.truncf %26 : vector<2x160xf32> to vector<2x160xbf16>
    %cst_21 = arith.constant dense<0.000000e+00> : vector<2x160xf32>
    %28 = tpu.matmul %27, %3, %cst_21 {dimension_numbers = #tpu.dot_dimension_numbers<[1], [0], [0], [1], [0, 0, 1, 1], [], []>} : vector<2x160xbf16>, vector<160x160xbf16>, vector<2x160xf32> -> vector<2x160xf32>
    %29 = arith.addf %28, %8 : vector<2x160xf32>
    %30 = vector.extract_strided_slice %29 {offsets = [0, 0], sizes = [2, 32], strides = [1, 1]} : vector<2x160xf32> to vector<2x32xf32>
    %31 = math.tanh %30 : vector<2x32xf32>
    %32 = arith.truncf %31 : vector<2x32xf32> to vector<2x32xbf16>
    %cst_22 = arith.constant dense<0.000000e+00> : vector<2x32xf32>
    %33 = tpu.matmul %32, %4, %cst_22 {dimension_numbers = #tpu.dot_dimension_numbers<[1], [0], [0], [1], [0, 0, 1, 1], [], []>} : vector<2x32xbf16>, vector<32x32xbf16>, vector<2x32xf32> -> vector<2x32xf32>
    %34 = vector.extract_strided_slice %29 {offsets = [0, 32], sizes = [2, 32], strides = [1, 1]} : vector<2x160xf32> to vector<2x32xf32>
    %35 = arith.addf %33, %34 : vector<2x32xf32>
    %36 = math.tanh %35 : vector<2x32xf32>
    %37 = arith.truncf %36 : vector<2x32xf32> to vector<2x32xbf16>
    %cst_23 = arith.constant dense<0.000000e+00> : vector<2x96xf32>
    %38 = tpu.matmul %37, %5, %cst_23 {dimension_numbers = #tpu.dot_dimension_numbers<[1], [0], [0], [1], [0, 0, 1, 1], [], []>} : vector<2x32xbf16>, vector<32x96xbf16>, vector<2x96xf32> -> vector<2x96xf32>
    %39 = arith.addf %38, %11 : vector<2x96xf32>
    %40 = vector.extract_strided_slice %39 {offsets = [0, 0], sizes = [2, 32], strides = [1, 1]} : vector<2x96xf32> to vector<2x32xf32>
    %41 = vector.extract_strided_slice %29 {offsets = [0, 64], sizes = [2, 32], strides = [1, 1]} : vector<2x160xf32> to vector<2x32xf32>
    %42 = arith.addf %40, %41 : vector<2x32xf32>
    %43 = arith.negf %42 : vector<2x32xf32>
    %44 = math.exp %43 : vector<2x32xf32>
    %cst_24 = arith.constant 1.000000e+00 : f32
    %45 = vector.broadcast %cst_24 : f32 to vector<2x32xf32>
    %46 = arith.addf %45, %44 : vector<2x32xf32>
    %47 = arith.divf %45, %46 : vector<2x32xf32>
    %48 = vector.extract_strided_slice %39 {offsets = [0, 32], sizes = [2, 32], strides = [1, 1]} : vector<2x96xf32> to vector<2x32xf32>
    %49 = vector.extract_strided_slice %29 {offsets = [0, 96], sizes = [2, 32], strides = [1, 1]} : vector<2x160xf32> to vector<2x32xf32>
    %50 = arith.addf %48, %49 : vector<2x32xf32>
    %51 = arith.negf %50 : vector<2x32xf32>
    %52 = math.exp %51 : vector<2x32xf32>
    %cst_25 = arith.constant 1.000000e+00 : f32
    %53 = vector.broadcast %cst_25 : f32 to vector<2x32xf32>
    %54 = arith.addf %53, %52 : vector<2x32xf32>
    %55 = arith.divf %53, %54 : vector<2x32xf32>
    %56 = vector.extract_strided_slice %39 {offsets = [0, 64], sizes = [2, 32], strides = [1, 1]} : vector<2x96xf32> to vector<2x32xf32>
    %57 = vector.extract_strided_slice %29 {offsets = [0, 128], sizes = [2, 32], strides = [1, 1]} : vector<2x160xf32> to vector<2x32xf32>
    %58 = arith.mulf %47, %57 : vector<2x32xf32>
    %59 = arith.addf %56, %58 : vector<2x32xf32>
    %60 = math.tanh %59 : vector<2x32xf32>
    %61 = vector.extract_strided_slice %23 {offsets = [0, 64], sizes = [2, 32], strides = [1, 1]} : vector<2x96xf32> to vector<2x32xf32>
    %cst_26 = arith.constant 1.000000e+00 : f32
    %62 = vector.broadcast %cst_26 : f32 to vector<2x32xf32>
    %63 = arith.subf %62, %55 : vector<2x32xf32>
    %64 = arith.mulf %63, %60 : vector<2x32xf32>
    %65 = arith.mulf %55, %61 : vector<2x32xf32>
    %66 = arith.addf %64, %65 : vector<2x32xf32>
    %67 = vector.extract_strided_slice %19 {offsets = [0, 0, 0], sizes = [1, 2, 1], strides = [1, 1, 1]} : vector<4x2x1xf32> to vector<1x2x1xf32>
    %68 = vector.shape_cast %67 : vector<1x2x1xf32> to vector<2x1xf32>
    %69 = vector.broadcast %68 : vector<2x1xf32> to vector<2x32xf32>
    %70 = arith.mulf %69, %36 : vector<2x32xf32>
    %71 = arith.subf %25, %70 : vector<2x32xf32>
    %72 = vector.extract_strided_slice %22 {offsets = [0, 0, 0], sizes = [1, 2, 1], strides = [1, 1, 1]} : vector<4x2x1xf32> to vector<1x2x1xf32>
    %73 = vector.shape_cast %72 : vector<1x2x1xf32> to vector<2x1xf32>
    %74 = vector.broadcast %73 : vector<2x1xf32> to vector<2x32xf32>
    %75 = arith.mulf %71, %74 : vector<2x32xf32>
    %76 = tpu.concatenate %31, %36, %66 in 1 : vector<2x32xf32>, vector<2x32xf32>, vector<2x32xf32> -> vector<2x96xf32>
    %77 = vector.extract_strided_slice %12 {offsets = [0, 32], sizes = [2, 32], strides = [1, 1]} : vector<2x128xf32> to vector<2x32xf32>
    %78 = vector.extract_strided_slice %13 {offsets = [0, 32], sizes = [2, 32], strides = [1, 1]} : vector<2x128xf32> to vector<2x32xf32>
    %79 = tpu.concatenate %76, %77, %78 in 1 : vector<2x96xf32>, vector<2x32xf32>, vector<2x32xf32> -> vector<2x160xf32>
    %80 = arith.truncf %79 : vector<2x160xf32> to vector<2x160xbf16>
    %cst_27 = arith.constant dense<0.000000e+00> : vector<2x160xf32>
    %81 = tpu.matmul %80, %3, %cst_27 {dimension_numbers = #tpu.dot_dimension_numbers<[1], [0], [0], [1], [0, 0, 1, 1], [], []>} : vector<2x160xbf16>, vector<160x160xbf16>, vector<2x160xf32> -> vector<2x160xf32>
    %82 = arith.addf %81, %8 : vector<2x160xf32>
    %83 = vector.extract_strided_slice %82 {offsets = [0, 0], sizes = [2, 32], strides = [1, 1]} : vector<2x160xf32> to vector<2x32xf32>
    %84 = math.tanh %83 : vector<2x32xf32>
    %85 = arith.truncf %84 : vector<2x32xf32> to vector<2x32xbf16>
    %cst_28 = arith.constant dense<0.000000e+00> : vector<2x32xf32>
    %86 = tpu.matmul %85, %4, %cst_28 {dimension_numbers = #tpu.dot_dimension_numbers<[1], [0], [0], [1], [0, 0, 1, 1], [], []>} : vector<2x32xbf16>, vector<32x32xbf16>, vector<2x32xf32> -> vector<2x32xf32>
    %87 = vector.extract_strided_slice %82 {offsets = [0, 32], sizes = [2, 32], strides = [1, 1]} : vector<2x160xf32> to vector<2x32xf32>
    %88 = arith.addf %86, %87 : vector<2x32xf32>
    %89 = math.tanh %88 : vector<2x32xf32>
    %90 = arith.truncf %89 : vector<2x32xf32> to vector<2x32xbf16>
    %cst_29 = arith.constant dense<0.000000e+00> : vector<2x96xf32>
    %91 = tpu.matmul %90, %5, %cst_29 {dimension_numbers = #tpu.dot_dimension_numbers<[1], [0], [0], [1], [0, 0, 1, 1], [], []>} : vector<2x32xbf16>, vector<32x96xbf16>, vector<2x96xf32> -> vector<2x96xf32>
    %92 = arith.addf %91, %11 : vector<2x96xf32>
    %93 = vector.extract_strided_slice %92 {offsets = [0, 0], sizes = [2, 32], strides = [1, 1]} : vector<2x96xf32> to vector<2x32xf32>
    %94 = vector.extract_strided_slice %82 {offsets = [0, 64], sizes = [2, 32], strides = [1, 1]} : vector<2x160xf32> to vector<2x32xf32>
    %95 = arith.addf %93, %94 : vector<2x32xf32>
    %96 = arith.negf %95 : vector<2x32xf32>
    %97 = math.exp %96 : vector<2x32xf32>
    %cst_30 = arith.constant 1.000000e+00 : f32
    %98 = vector.broadcast %cst_30 : f32 to vector<2x32xf32>
    %99 = arith.addf %98, %97 : vector<2x32xf32>
    %100 = arith.divf %98, %99 : vector<2x32xf32>
    %101 = vector.extract_strided_slice %92 {offsets = [0, 32], sizes = [2, 32], strides = [1, 1]} : vector<2x96xf32> to vector<2x32xf32>
    %102 = vector.extract_strided_slice %82 {offsets = [0, 96], sizes = [2, 32], strides = [1, 1]} : vector<2x160xf32> to vector<2x32xf32>
    %103 = arith.addf %101, %102 : vector<2x32xf32>
    %104 = arith.negf %103 : vector<2x32xf32>
    %105 = math.exp %104 : vector<2x32xf32>
    %cst_31 = arith.constant 1.000000e+00 : f32
    %106 = vector.broadcast %cst_31 : f32 to vector<2x32xf32>
    %107 = arith.addf %106, %105 : vector<2x32xf32>
    %108 = arith.divf %106, %107 : vector<2x32xf32>
    %109 = vector.extract_strided_slice %92 {offsets = [0, 64], sizes = [2, 32], strides = [1, 1]} : vector<2x96xf32> to vector<2x32xf32>
    %110 = vector.extract_strided_slice %82 {offsets = [0, 128], sizes = [2, 32], strides = [1, 1]} : vector<2x160xf32> to vector<2x32xf32>
    %111 = arith.mulf %100, %110 : vector<2x32xf32>
    %112 = arith.addf %109, %111 : vector<2x32xf32>
    %113 = math.tanh %112 : vector<2x32xf32>
    %114 = vector.extract_strided_slice %76 {offsets = [0, 64], sizes = [2, 32], strides = [1, 1]} : vector<2x96xf32> to vector<2x32xf32>
    %cst_32 = arith.constant 1.000000e+00 : f32
    %115 = vector.broadcast %cst_32 : f32 to vector<2x32xf32>
    %116 = arith.subf %115, %108 : vector<2x32xf32>
    %117 = arith.mulf %116, %113 : vector<2x32xf32>
    %118 = arith.mulf %108, %114 : vector<2x32xf32>
    %119 = arith.addf %117, %118 : vector<2x32xf32>
    %120 = vector.extract_strided_slice %19 {offsets = [1, 0, 0], sizes = [1, 2, 1], strides = [1, 1, 1]} : vector<4x2x1xf32> to vector<1x2x1xf32>
    %121 = vector.shape_cast %120 : vector<1x2x1xf32> to vector<2x1xf32>
    %122 = vector.broadcast %121 : vector<2x1xf32> to vector<2x32xf32>
    %123 = arith.mulf %122, %89 : vector<2x32xf32>
    %124 = arith.subf %78, %123 : vector<2x32xf32>
    %125 = vector.extract_strided_slice %22 {offsets = [1, 0, 0], sizes = [1, 2, 1], strides = [1, 1, 1]} : vector<4x2x1xf32> to vector<1x2x1xf32>
    %126 = vector.shape_cast %125 : vector<1x2x1xf32> to vector<2x1xf32>
    %127 = vector.broadcast %126 : vector<2x1xf32> to vector<2x32xf32>
    %128 = arith.mulf %124, %127 : vector<2x32xf32>
    %129 = tpu.concatenate %84, %89, %119 in 1 : vector<2x32xf32>, vector<2x32xf32>, vector<2x32xf32> -> vector<2x96xf32>
    %130 = vector.extract_strided_slice %12 {offsets = [0, 64], sizes = [2, 32], strides = [1, 1]} : vector<2x128xf32> to vector<2x32xf32>
    %131 = vector.extract_strided_slice %13 {offsets = [0, 64], sizes = [2, 32], strides = [1, 1]} : vector<2x128xf32> to vector<2x32xf32>
    %132 = tpu.concatenate %129, %130, %131 in 1 : vector<2x96xf32>, vector<2x32xf32>, vector<2x32xf32> -> vector<2x160xf32>
    %133 = arith.truncf %132 : vector<2x160xf32> to vector<2x160xbf16>
    %cst_33 = arith.constant dense<0.000000e+00> : vector<2x160xf32>
    %134 = tpu.matmul %133, %3, %cst_33 {dimension_numbers = #tpu.dot_dimension_numbers<[1], [0], [0], [1], [0, 0, 1, 1], [], []>} : vector<2x160xbf16>, vector<160x160xbf16>, vector<2x160xf32> -> vector<2x160xf32>
    %135 = arith.addf %134, %8 : vector<2x160xf32>
    %136 = vector.extract_strided_slice %135 {offsets = [0, 0], sizes = [2, 32], strides = [1, 1]} : vector<2x160xf32> to vector<2x32xf32>
    %137 = math.tanh %136 : vector<2x32xf32>
    %138 = arith.truncf %137 : vector<2x32xf32> to vector<2x32xbf16>
    %cst_34 = arith.constant dense<0.000000e+00> : vector<2x32xf32>
    %139 = tpu.matmul %138, %4, %cst_34 {dimension_numbers = #tpu.dot_dimension_numbers<[1], [0], [0], [1], [0, 0, 1, 1], [], []>} : vector<2x32xbf16>, vector<32x32xbf16>, vector<2x32xf32> -> vector<2x32xf32>
    %140 = vector.extract_strided_slice %135 {offsets = [0, 32], sizes = [2, 32], strides = [1, 1]} : vector<2x160xf32> to vector<2x32xf32>
    %141 = arith.addf %139, %140 : vector<2x32xf32>
    %142 = math.tanh %141 : vector<2x32xf32>
    %143 = arith.truncf %142 : vector<2x32xf32> to vector<2x32xbf16>
    %cst_35 = arith.constant dense<0.000000e+00> : vector<2x96xf32>
    %144 = tpu.matmul %143, %5, %cst_35 {dimension_numbers = #tpu.dot_dimension_numbers<[1], [0], [0], [1], [0, 0, 1, 1], [], []>} : vector<2x32xbf16>, vector<32x96xbf16>, vector<2x96xf32> -> vector<2x96xf32>
    %145 = arith.addf %144, %11 : vector<2x96xf32>
    %146 = vector.extract_strided_slice %145 {offsets = [0, 0], sizes = [2, 32], strides = [1, 1]} : vector<2x96xf32> to vector<2x32xf32>
    %147 = vector.extract_strided_slice %135 {offsets = [0, 64], sizes = [2, 32], strides = [1, 1]} : vector<2x160xf32> to vector<2x32xf32>
    %148 = arith.addf %146, %147 : vector<2x32xf32>
    %149 = arith.negf %148 : vector<2x32xf32>
    %150 = math.exp %149 : vector<2x32xf32>
    %cst_36 = arith.constant 1.000000e+00 : f32
    %151 = vector.broadcast %cst_36 : f32 to vector<2x32xf32>
    %152 = arith.addf %151, %150 : vector<2x32xf32>
    %153 = arith.divf %151, %152 : vector<2x32xf32>
    %154 = vector.extract_strided_slice %145 {offsets = [0, 32], sizes = [2, 32], strides = [1, 1]} : vector<2x96xf32> to vector<2x32xf32>
    %155 = vector.extract_strided_slice %135 {offsets = [0, 96], sizes = [2, 32], strides = [1, 1]} : vector<2x160xf32> to vector<2x32xf32>
    %156 = arith.addf %154, %155 : vector<2x32xf32>
    %157 = arith.negf %156 : vector<2x32xf32>
    %158 = math.exp %157 : vector<2x32xf32>
    %cst_37 = arith.constant 1.000000e+00 : f32
    %159 = vector.broadcast %cst_37 : f32 to vector<2x32xf32>
    %160 = arith.addf %159, %158 : vector<2x32xf32>
    %161 = arith.divf %159, %160 : vector<2x32xf32>
    %162 = vector.extract_strided_slice %145 {offsets = [0, 64], sizes = [2, 32], strides = [1, 1]} : vector<2x96xf32> to vector<2x32xf32>
    %163 = vector.extract_strided_slice %135 {offsets = [0, 128], sizes = [2, 32], strides = [1, 1]} : vector<2x160xf32> to vector<2x32xf32>
    %164 = arith.mulf %153, %163 : vector<2x32xf32>
    %165 = arith.addf %162, %164 : vector<2x32xf32>
    %166 = math.tanh %165 : vector<2x32xf32>
    %167 = vector.extract_strided_slice %129 {offsets = [0, 64], sizes = [2, 32], strides = [1, 1]} : vector<2x96xf32> to vector<2x32xf32>
    %cst_38 = arith.constant 1.000000e+00 : f32
    %168 = vector.broadcast %cst_38 : f32 to vector<2x32xf32>
    %169 = arith.subf %168, %161 : vector<2x32xf32>
    %170 = arith.mulf %169, %166 : vector<2x32xf32>
    %171 = arith.mulf %161, %167 : vector<2x32xf32>
    %172 = arith.addf %170, %171 : vector<2x32xf32>
    %173 = vector.extract_strided_slice %19 {offsets = [2, 0, 0], sizes = [1, 2, 1], strides = [1, 1, 1]} : vector<4x2x1xf32> to vector<1x2x1xf32>
    %174 = vector.shape_cast %173 : vector<1x2x1xf32> to vector<2x1xf32>
    %175 = vector.broadcast %174 : vector<2x1xf32> to vector<2x32xf32>
    %176 = arith.mulf %175, %142 : vector<2x32xf32>
    %177 = arith.subf %131, %176 : vector<2x32xf32>
    %178 = vector.extract_strided_slice %22 {offsets = [2, 0, 0], sizes = [1, 2, 1], strides = [1, 1, 1]} : vector<4x2x1xf32> to vector<1x2x1xf32>
    %179 = vector.shape_cast %178 : vector<1x2x1xf32> to vector<2x1xf32>
    %180 = vector.broadcast %179 : vector<2x1xf32> to vector<2x32xf32>
    %181 = arith.mulf %177, %180 : vector<2x32xf32>
    %182 = tpu.concatenate %137, %142, %172 in 1 : vector<2x32xf32>, vector<2x32xf32>, vector<2x32xf32> -> vector<2x96xf32>
    %183 = vector.extract_strided_slice %12 {offsets = [0, 96], sizes = [2, 32], strides = [1, 1]} : vector<2x128xf32> to vector<2x32xf32>
    %184 = vector.extract_strided_slice %13 {offsets = [0, 96], sizes = [2, 32], strides = [1, 1]} : vector<2x128xf32> to vector<2x32xf32>
    %185 = tpu.concatenate %182, %183, %184 in 1 : vector<2x96xf32>, vector<2x32xf32>, vector<2x32xf32> -> vector<2x160xf32>
    %186 = arith.truncf %185 : vector<2x160xf32> to vector<2x160xbf16>
    %cst_39 = arith.constant dense<0.000000e+00> : vector<2x160xf32>
    %187 = tpu.matmul %186, %3, %cst_39 {dimension_numbers = #tpu.dot_dimension_numbers<[1], [0], [0], [1], [0, 0, 1, 1], [], []>} : vector<2x160xbf16>, vector<160x160xbf16>, vector<2x160xf32> -> vector<2x160xf32>
    %188 = arith.addf %187, %8 : vector<2x160xf32>
    %189 = vector.extract_strided_slice %188 {offsets = [0, 0], sizes = [2, 32], strides = [1, 1]} : vector<2x160xf32> to vector<2x32xf32>
    %190 = math.tanh %189 : vector<2x32xf32>
    %191 = arith.truncf %190 : vector<2x32xf32> to vector<2x32xbf16>
    %cst_40 = arith.constant dense<0.000000e+00> : vector<2x32xf32>
    %192 = tpu.matmul %191, %4, %cst_40 {dimension_numbers = #tpu.dot_dimension_numbers<[1], [0], [0], [1], [0, 0, 1, 1], [], []>} : vector<2x32xbf16>, vector<32x32xbf16>, vector<2x32xf32> -> vector<2x32xf32>
    %193 = vector.extract_strided_slice %188 {offsets = [0, 32], sizes = [2, 32], strides = [1, 1]} : vector<2x160xf32> to vector<2x32xf32>
    %194 = arith.addf %192, %193 : vector<2x32xf32>
    %195 = math.tanh %194 : vector<2x32xf32>
    %196 = arith.truncf %195 : vector<2x32xf32> to vector<2x32xbf16>
    %cst_41 = arith.constant dense<0.000000e+00> : vector<2x96xf32>
    %197 = tpu.matmul %196, %5, %cst_41 {dimension_numbers = #tpu.dot_dimension_numbers<[1], [0], [0], [1], [0, 0, 1, 1], [], []>} : vector<2x32xbf16>, vector<32x96xbf16>, vector<2x96xf32> -> vector<2x96xf32>
    %198 = arith.addf %197, %11 : vector<2x96xf32>
    %199 = vector.extract_strided_slice %198 {offsets = [0, 0], sizes = [2, 32], strides = [1, 1]} : vector<2x96xf32> to vector<2x32xf32>
    %200 = vector.extract_strided_slice %188 {offsets = [0, 64], sizes = [2, 32], strides = [1, 1]} : vector<2x160xf32> to vector<2x32xf32>
    %201 = arith.addf %199, %200 : vector<2x32xf32>
    %202 = arith.negf %201 : vector<2x32xf32>
    %203 = math.exp %202 : vector<2x32xf32>
    %cst_42 = arith.constant 1.000000e+00 : f32
    %204 = vector.broadcast %cst_42 : f32 to vector<2x32xf32>
    %205 = arith.addf %204, %203 : vector<2x32xf32>
    %206 = arith.divf %204, %205 : vector<2x32xf32>
    %207 = vector.extract_strided_slice %198 {offsets = [0, 32], sizes = [2, 32], strides = [1, 1]} : vector<2x96xf32> to vector<2x32xf32>
    %208 = vector.extract_strided_slice %188 {offsets = [0, 96], sizes = [2, 32], strides = [1, 1]} : vector<2x160xf32> to vector<2x32xf32>
    %209 = arith.addf %207, %208 : vector<2x32xf32>
    %210 = arith.negf %209 : vector<2x32xf32>
    %211 = math.exp %210 : vector<2x32xf32>
    %cst_43 = arith.constant 1.000000e+00 : f32
    %212 = vector.broadcast %cst_43 : f32 to vector<2x32xf32>
    %213 = arith.addf %212, %211 : vector<2x32xf32>
    %214 = arith.divf %212, %213 : vector<2x32xf32>
    %215 = vector.extract_strided_slice %198 {offsets = [0, 64], sizes = [2, 32], strides = [1, 1]} : vector<2x96xf32> to vector<2x32xf32>
    %216 = vector.extract_strided_slice %188 {offsets = [0, 128], sizes = [2, 32], strides = [1, 1]} : vector<2x160xf32> to vector<2x32xf32>
    %217 = arith.mulf %206, %216 : vector<2x32xf32>
    %218 = arith.addf %215, %217 : vector<2x32xf32>
    %219 = math.tanh %218 : vector<2x32xf32>
    %220 = vector.extract_strided_slice %182 {offsets = [0, 64], sizes = [2, 32], strides = [1, 1]} : vector<2x96xf32> to vector<2x32xf32>
    %cst_44 = arith.constant 1.000000e+00 : f32
    %221 = vector.broadcast %cst_44 : f32 to vector<2x32xf32>
    %222 = arith.subf %221, %214 : vector<2x32xf32>
    %223 = arith.mulf %222, %219 : vector<2x32xf32>
    %224 = arith.mulf %214, %220 : vector<2x32xf32>
    %225 = arith.addf %223, %224 : vector<2x32xf32>
    %226 = vector.extract_strided_slice %19 {offsets = [3, 0, 0], sizes = [1, 2, 1], strides = [1, 1, 1]} : vector<4x2x1xf32> to vector<1x2x1xf32>
    %227 = vector.shape_cast %226 : vector<1x2x1xf32> to vector<2x1xf32>
    %228 = vector.broadcast %227 : vector<2x1xf32> to vector<2x32xf32>
    %229 = arith.mulf %228, %195 : vector<2x32xf32>
    %230 = arith.subf %184, %229 : vector<2x32xf32>
    %231 = vector.extract_strided_slice %22 {offsets = [3, 0, 0], sizes = [1, 2, 1], strides = [1, 1, 1]} : vector<4x2x1xf32> to vector<1x2x1xf32>
    %232 = vector.shape_cast %231 : vector<1x2x1xf32> to vector<2x1xf32>
    %233 = vector.broadcast %232 : vector<2x1xf32> to vector<2x32xf32>
    %234 = arith.mulf %230, %233 : vector<2x32xf32>
    %235 = tpu.concatenate %190, %195, %225 in 1 : vector<2x32xf32>, vector<2x32xf32>, vector<2x32xf32> -> vector<2x96xf32>
    %c0_45 = arith.constant 0 : index
    %c0_46 = arith.constant 0 : index
    %236 = vector.load %arg13[%c0_45, %c0_46] : memref<2x96xf32, #tpu.memory_space<vmem>>, vector<2x96xf32>
    tpu.vector_store %arg13[%c0_45, %c0_46], %235 {strides = array<i32>} : memref<2x96xf32, #tpu.memory_space<vmem>>, vector<2x96xf32>,
    %237 = tpu.concatenate %36, %89, %142, %195 in 1 : vector<2x32xf32>, vector<2x32xf32>, vector<2x32xf32>, vector<2x32xf32> -> vector<2x128xf32>
    %c0_47 = arith.constant 0 : index
    %c0_48 = arith.constant 0 : index
    %238 = vector.load %arg11[%c0_47, %c0_48] : memref<2x128xf32, #tpu.memory_space<vmem>>, vector<2x128xf32>
    tpu.vector_store %arg11[%c0_47, %c0_48], %237 {strides = array<i32>} : memref<2x128xf32, #tpu.memory_space<vmem>>, vector<2x128xf32>,
    %239 = tpu.concatenate %66, %119, %172, %225 in 1 : vector<2x32xf32>, vector<2x32xf32>, vector<2x32xf32>, vector<2x32xf32> -> vector<2x128xf32>
    %c0_49 = arith.constant 0 : index
    %c0_50 = arith.constant 0 : index
    %240 = vector.load %arg12[%c0_49, %c0_50] : memref<2x128xf32, #tpu.memory_space<vmem>>, vector<2x128xf32>
    tpu.vector_store %arg12[%c0_49, %c0_50], %239 {strides = array<i32>} : memref<2x128xf32, #tpu.memory_space<vmem>>, vector<2x128xf32>,
    %241 = tpu.concatenate %75, %128, %181, %234 in 1 : vector<2x32xf32>, vector<2x32xf32>, vector<2x32xf32>, vector<2x32xf32> -> vector<2x128xf32>
    %c0_51 = arith.constant 0 : index
    %c0_52 = arith.constant 0 : index
    %242 = vector.load %arg10[%c0_51, %c0_52] : memref<2x128xf32, #tpu.memory_space<vmem>>, vector<2x128xf32>
    tpu.vector_store %arg10[%c0_51, %c0_52], %241 {strides = array<i32>} : memref<2x128xf32, #tpu.memory_space<vmem>>, vector<2x128xf32>,
    return
  }
  func.func @transform_0(%arg0: i32, %arg1: i32) -> (i32, i32) {
    %c0_i32 = arith.constant 0 : i32
    return %arg0, %arg1 : i32, i32
  }
  func.func @transform_1(%arg0: i32, %arg1: i32) -> (i32, i32) {
    %c0_i32 = arith.constant 0 : i32
    return %arg0, %arg1 : i32, i32
  }
  func.func @transform_2(%arg0: i32, %arg1: i32) -> (i32, i32, i32) {
    %c0_i32 = arith.constant 0 : i32
    %c0_i32_0 = arith.constant 0 : i32
    return %arg1, %arg0, %c0_i32 : i32, i32, i32
  }
  func.func @transform_3(%arg0: i32, %arg1: i32) -> (i32, i32) {
    %c0_i32 = arith.constant 0 : i32
    %c0_i32_0 = arith.constant 0 : i32
    %c0_i32_1 = arith.constant 0 : i32
    return %c0_i32, %c0_i32_0 : i32, i32
  }
  func.func @transform_4(%arg0: i32, %arg1: i32) -> (i32, i32) {
    %c0_i32 = arith.constant 0 : i32
    %c0_i32_0 = arith.constant 0 : i32
    %c0_i32_1 = arith.constant 0 : i32
    return %c0_i32, %c0_i32_0 : i32, i32
  }
  func.func @transform_5(%arg0: i32, %arg1: i32) -> (i32, i32) {
    %c0_i32 = arith.constant 0 : i32
    %c0_i32_0 = arith.constant 0 : i32
    %c0_i32_1 = arith.constant 0 : i32
    return %c0_i32, %c0_i32_0 : i32, i32
  }
  func.func @transform_6(%arg0: i32, %arg1: i32) -> (i32, i32) {
    %c0_i32 = arith.constant 0 : i32
    %c0_i32_0 = arith.constant 0 : i32
    %c0_i32_1 = arith.constant 0 : i32
    return %c0_i32, %c0_i32_0 : i32, i32
  }
  func.func @transform_7(%arg0: i32, %arg1: i32) -> (i32, i32) {
    %c0_i32 = arith.constant 0 : i32
    %c0_i32_0 = arith.constant 0 : i32
    %c0_i32_1 = arith.constant 0 : i32
    return %c0_i32, %c0_i32_0 : i32, i32
  }
  func.func @transform_8(%arg0: i32, %arg1: i32) -> (i32, i32) {
    %c0_i32 = arith.constant 0 : i32
    return %arg0, %arg1 : i32, i32
  }
  func.func @transform_9(%arg0: i32, %arg1: i32) -> (i32, i32) {
    %c0_i32 = arith.constant 0 : i32
    return %arg0, %arg1 : i32, i32
  }
  func.func @transform_10(%arg0: i32, %arg1: i32) -> (i32, i32) {
    %c0_i32 = arith.constant 0 : i32
    return %arg0, %arg1 : i32, i32
  }
}

</mosaic_0001>

<llo_original>
// kernel: tpu_custom_call.1
$region0: #{tpu_custom_call.1}
  #allocation0 [shape = 'u32[]', space=smem, size = 0x4, offset = 0x4, fixed_abs, tag = 'smem constant byte address 0x4 - core index']
  #allocation1 [shape = 'u32[144,128]{1,0:T(1,128)}', space=vmem, size = 0x12000, scoped, tag = 'internal scratch']
  #allocation2 [shape = 'f32[2,96]{1,0:T(2,128)}', space=vmem, size = 0x400, scoped, tag = 'scratch operand']
  %s0 = inlined_call_operand.vmem [shape: f32[2,256], index: 0, kind: input, shape index: {}]
  %s1 = inlined_call_operand.vmem [shape: f32[2,256], index: 1, kind: input, shape index: {}]
  %s2 = inlined_call_operand.vmem [shape: f32[8,2,1], index: 2, kind: input, shape index: {}]
  %s3 = inlined_call_operand.hbm [shape: bf16[160,160], index: 3, kind: input, shape index: {}]
  %s4 = inlined_call_operand.vmem [shape: f32[1,160], index: 4, kind: input, shape index: {}]
  %s5 = inlined_call_operand.vmem [shape: bf16[32,32], index: 5, kind: input, shape index: {}]
  %s6 = inlined_call_operand.hbm [shape: bf16[32,96], index: 6, kind: input, shape index: {}]
  %s7 = inlined_call_operand.vmem [shape: f32[1,96], index: 7, kind: input, shape index: {}]
  %s8 = inlined_call_operand.hbm [shape: f32[2,256], index: 8, kind: output, shape index: {0}]
  %s9 = inlined_call_operand.hbm [shape: f32[2,256], index: 9, kind: output, shape index: {1}]
  %s10 = inlined_call_operand.hbm [shape: f32[2,256], index: 10, kind: output, shape index: {2}]
  %11 = xla_tuple %s8, %s9, %s10
  %s12 = sld [smem:[#allocation0]]
  $region93: #{tpu_custom_call.1} parent=0
    _
  %s14 = ssub.s32 1, %s12
  %s15 = scalar_select 0, %s14, %s12
  $region1: #{tpu_custom_call.1} parent=0
    #allocation3 [shape = 'u8[81920]{0}', space=vmem, size = 0x14000, scoped, tag = 'input window, operand 3, single buffered']
    #allocation4 [shape = 's32[2]{0}', space=sflag, size = 0x8, scoped, tag = 'scoped memory for tpu_custom_call.1']
    #allocation5 [shape = 's32[2]{0}', space=sflag, size = 0x8, scoped, tag = 'scoped memory for tpu_custom_call.1']
    #allocation6 [shape = 'u8[8192]{0}', space=vmem, size = 0x2000, scoped, tag = 'input window, operand 6, single buffered']
    #allocation7 [shape = 's32[1]{0}', space=sflag, size = 0x4, scoped, tag = 'scoped memory for tpu_custom_call.1']
    #allocation8 [shape = 'u8[2048]{0}', space=vmem, size = 0x800, scoped, tag = 'output window, operand 0']
    #allocation9 [shape = 'u8[2048]{0}', space=vmem, size = 0x800, scoped, tag = 'output window, operand 1']
    #allocation10 [shape = 's32[2]{0}', space=sflag, size = 0x8, scoped, tag = 'scoped memory for tpu_custom_call.1']
    #allocation11 [shape = 'u8[2048]{0}', space=vmem, size = 0x800, scoped, tag = 'output window, operand 2']
    %16 = vsyncpa [#allocation4], 0
    %17 = vsyncpa [#allocation7], 0
    %18 = vsyncpa [#allocation5], 0
    %s19 = scalar_lea.sflag [#allocation5], 1
    %20 = vsyncpa %s19, 0
    %21 = vsyncpa [#allocation10], 0
    %s22 = scalar_lea.sflag [#allocation10], 1
    %23 = vsyncpa %s22, 0
    loop: start=0, step=1, limit=4
    $region2: #{tpu_custom_call.1} parent=1 // loop_pre_header
      _
    $region3: #{tpu_custom_call.1} parent=1 // loop_header
      %s25 = sphi 0, %s29
      %p26 = scmp.ge.s32.totalorder %s25, 4
      %s32 = sphi 0, %s44
      %s33 = sphi 0, %s40
      %s34 = sphi 0, %s32
      %s35 = sphi 0, %s33
      %s36 = sphi 0, %s34
      %s37 = sphi 0, %s35
      %s49 = sphi 0, %s51
      %s52 = sphi 0, %s49
      %s53 = sphi 0, %s52
      %s69 = sphi 0, %s53
      %s77 = sphi 0, %s79
      %s80 = sphi 0, %s77
      %s81 = sphi 0, %s80
      %s97 = sphi 0, %s81
      %s105 = sphi 0, %s107
      %s108 = sphi 0, %s105
      %s109 = sphi 0, %s108
      %s125 = sphi 0, %s109
      %s129 = sphi 0, %s129
      %s131 = sphi 0, %s129
      %s132 = sphi 0, %s131
      %s146 = sphi 0, %s132
      %s150 = sphi 0, %s150
      %s152 = sphi 0, %s150
      %s153 = sphi 0, %s152
      %s167 = sphi 0, %s153
      %s171 = sphi 0, %s171
      %s173 = sphi 0, %s171
      %s174 = sphi 0, %s173
      %s188 = sphi 0, %s174
      %s192 = sphi 0, %s192
      %s194 = sphi 0, %s192
      %s195 = sphi 0, %s194
      %s209 = sphi 0, %s195
      %s213 = sphi 0, %s213
      %s215 = sphi 0, %s213
      %s216 = sphi 0, %s215
      %s230 = sphi 0, %s216
      %s238 = sphi 0, %s240
      %s241 = sphi 0, %s238
      %s242 = sphi 0, %s241
      %s258 = sphi 0, %s242
      %s266 = sphi 0, %s268
      %s269 = sphi 0, %s266
      %s270 = sphi 0, %s269
      %s286 = sphi 0, %s270
      %s294 = sphi 0, %s296
      %s297 = sphi 0, %s294
      %s298 = sphi 0, %s297
      %s314 = sphi 0, %s298
    $region4: #{tpu_custom_call.1} parent=1 // loop_header_branch
      %28 = sbr.rel (%p26) target = $region8
    $region5: #{tpu_custom_call.1} parent=1 // loop_body
      %s30 = ssub.s32 %s25, 1
      %s31 = ssub.s32 %s25, 2
      %s38 = sadd.s32 1, %s33
      %p39 = scmp.ge.s32.totalorder %s38, 2
      %s40 = scalar_select %p39, 0, %s38
      %s41 = sadd.s32 1, %s32
      %s42 = scalar_select %p39, %s41, %s32
      %p43 = scmp.ge.s32.totalorder %s42, 1
      %s44 = scalar_select %p43, 0, %s42
      %s45 = ssub.s32 %s32, %s44
      %s46 = ssub.s32 %s33, %s40
      %s47 = sor.u32 %s45, %s46
      %p48 = scmp.eq.s32.totalorder %s47, 0
      %s50 = sadd.s32 %s49, 1
      %s51 = scalar_select %p48, %s49, %s50
      %p54 = pneg %p48
      %p55 = scmp.eq.s32.totalorder %s25, 1
      %p56 = por %p54, %p55
      %p57 = scmp.ne.s32.totalorder %s49, %s52
      %p58 = scmp.eq.s32.totalorder %s25, 0
      %p59 = por %p57, %p58
      %p60 = scmp.ne.s32.totalorder %s49, %s52
      %p61 = scmp.eq.s32.totalorder %s30, 1
      %p62 = por %p60, %p61
      %p63 = scmp.ne.s32.totalorder %s52, %s53
      %p64 = scmp.eq.s32.totalorder %s30, 0
      %p65 = por %p63, %p64
      %p66 = scmp.ne.s32.totalorder %s52, %s53
      %p67 = scmp.eq.s32.totalorder %s31, 1
      %p68 = por %p66, %p67
      %p70 = scmp.ne.s32.totalorder %s53, %s69
      %p71 = scmp.eq.s32.totalorder %s31, 0
      %p72 = por %p70, %p71
      %s73 = ssub.s32 %s32, %s44
      %s74 = ssub.s32 %s33, %s40
      %s75 = sor.u32 %s73, %s74
      %p76 = scmp.eq.s32.totalorder %s75, 0
      %s78 = sadd.s32 %s77, 1
      %s79 = scalar_select %p76, %s77, %s78
      %p82 = pneg %p76
      %p83 = scmp.eq.s32.totalorder %s25, 1
      %p84 = por %p82, %p83
      %p85 = scmp.ne.s32.totalorder %s77, %s80
      %p86 = scmp.eq.s32.totalorder %s25, 0
      %p87 = por %p85, %p86
      %p88 = scmp.ne.s32.totalorder %s77, %s80
      %p89 = scmp.eq.s32.totalorder %s30, 1
      %p90 = por %p88, %p89
      %p91 = scmp.ne.s32.totalorder %s80, %s81
      %p92 = scmp.eq.s32.totalorder %s30, 0
      %p93 = por %p91, %p92
      %p94 = scmp.ne.s32.totalorder %s80, %s81
      %p95 = scmp.eq.s32.totalorder %s31, 1
      %p96 = por %p94, %p95
      %p98 = scmp.ne.s32.totalorder %s81, %s97
      %p99 = scmp.eq.s32.totalorder %s31, 0
      %p100 = por %p98, %p99
      %s101 = ssub.s32 %s33, %s40
      %s102 = ssub.s32 %s32, %s44
      %s103 = sor.u32 %s101, %s102
      %p104 = scmp.eq.s32.totalorder %s103, 0
      %s106 = sadd.s32 %s105, 1
      %s107 = scalar_select %p104, %s105, %s106
      %p110 = pneg %p104
      %p111 = scmp.eq.s32.totalorder %s25, 1
      %p112 = por %p110, %p111
      %p113 = scmp.ne.s32.totalorder %s105, %s108
      %p114 = scmp.eq.s32.totalorder %s25, 0
      %p115 = por %p113, %p114
      %p116 = scmp.ne.s32.totalorder %s105, %s108
      %p117 = scmp.eq.s32.totalorder %s30, 1
      %p118 = por %p116, %p117
      %p119 = scmp.ne.s32.totalorder %s108, %s109
      %p120 = scmp.eq.s32.totalorder %s30, 0
      %p121 = por %p119, %p120
      %p122 = scmp.ne.s32.totalorder %s108, %s109
      %p123 = scmp.eq.s32.totalorder %s31, 1
      %p124 = por %p122, %p123
      %p126 = scmp.ne.s32.totalorder %s109, %s125
      %p127 = scmp.eq.s32.totalorder %s31, 0
      %p128 = por %p126, %p127
      %s130 = sadd.s32 %s129, 1
      %p133 = scmp.eq.s32.totalorder %s25, 1
      %p134 = scmp.ne.s32.totalorder %s129, %s131
      %p135 = scmp.eq.s32.totalorder %s25, 0
      %p136 = por %p134, %p135
      %p137 = scmp.ne.s32.totalorder %s129, %s131
      %p138 = scmp.eq.s32.totalorder %s30, 1
      %p139 = por %p137, %p138
      %p140 = scmp.ne.s32.totalorder %s131, %s132
      %p141 = scmp.eq.s32.totalorder %s30, 0
      %p142 = por %p140, %p141
      %p143 = scmp.ne.s32.totalorder %s131, %s132
      %p144 = scmp.eq.s32.totalorder %s31, 1
      %p145 = por %p143, %p144
      %p147 = scmp.ne.s32.totalorder %s132, %s146
      %p148 = scmp.eq.s32.totalorder %s31, 0
      %p149 = por %p147, %p148
      %s151 = sadd.s32 %s150, 1
      %p154 = scmp.eq.s32.totalorder %s25, 1
      %p155 = scmp.ne.s32.totalorder %s150, %s152
      %p156 = scmp.eq.s32.totalorder %s25, 0
      %p157 = por %p155, %p156
      %p158 = scmp.ne.s32.totalorder %s150, %s152
      %p159 = scmp.eq.s32.totalorder %s30, 1
      %p160 = por %p158, %p159
      %p161 = scmp.ne.s32.totalorder %s152, %s153
      %p162 = scmp.eq.s32.totalorder %s30, 0
      %p163 = por %p161, %p162
      %p164 = scmp.ne.s32.totalorder %s152, %s153
      %p165 = scmp.eq.s32.totalorder %s31, 1
      %p166 = por %p164, %p165
      %p168 = scmp.ne.s32.totalorder %s153, %s167
      %p169 = scmp.eq.s32.totalorder %s31, 0
      %p170 = por %p168, %p169
      %s172 = sadd.s32 %s171, 1
      %p175 = scmp.eq.s32.totalorder %s25, 1
      %p176 = scmp.ne.s32.totalorder %s171, %s173
      %p177 = scmp.eq.s32.totalorder %s25, 0
      %p178 = por %p176, %p177
      %p179 = scmp.ne.s32.totalorder %s171, %s173
      %p180 = scmp.eq.s32.totalorder %s30, 1
      %p181 = por %p179, %p180
      %p182 = scmp.ne.s32.totalorder %s173, %s174
      %p183 = scmp.eq.s32.totalorder %s30, 0
      %p184 = por %p182, %p183
      %p185 = scmp.ne.s32.totalorder %s173, %s174
      %p186 = scmp.eq.s32.totalorder %s31, 1
      %p187 = por %p185, %p186
      %p189 = scmp.ne.s32.totalorder %s174, %s188
      %p190 = scmp.eq.s32.totalorder %s31, 0
      %p191 = por %p189, %p190
      %s193 = sadd.s32 %s192, 1
      %p196 = scmp.eq.s32.totalorder %s25, 1
      %p197 = scmp.ne.s32.totalorder %s192, %s194
      %p198 = scmp.eq.s32.totalorder %s25, 0
      %p199 = por %p197, %p198
      %p200 = scmp.ne.s32.totalorder %s192, %s194
      %p201 = scmp.eq.s32.totalorder %s30, 1
      %p202 = por %p200, %p201
      %p203 = scmp.ne.s32.totalorder %s194, %s195
      %p204 = scmp.eq.s32.totalorder %s30, 0
      %p205 = por %p203, %p204
      %p206 = scmp.ne.s32.totalorder %s194, %s195
      %p207 = scmp.eq.s32.totalorder %s31, 1
      %p208 = por %p206, %p207
      %p210 = scmp.ne.s32.totalorder %s195, %s209
      %p211 = scmp.eq.s32.totalorder %s31, 0
      %p212 = por %p210, %p211
      %s214 = sadd.s32 %s213, 1
      %p217 = scmp.eq.s32.totalorder %s25, 1
      %p218 = scmp.ne.s32.totalorder %s213, %s215
      %p219 = scmp.eq.s32.totalorder %s25, 0
      %p220 = por %p218, %p219
      %p221 = scmp.ne.s32.totalorder %s213, %s215
      %p222 = scmp.eq.s32.totalorder %s30, 1
      %p223 = por %p221, %p222
      %p224 = scmp.ne.s32.totalorder %s215, %s216
      %p225 = scmp.eq.s32.totalorder %s30, 0
      %p226 = por %p224, %p225
      %p227 = scmp.ne.s32.totalorder %s215, %s216
      %p228 = scmp.eq.s32.totalorder %s31, 1
      %p229 = por %p227, %p228
      %p231 = scmp.ne.s32.totalorder %s216, %s230
      %p232 = scmp.eq.s32.totalorder %s31, 0
      %p233 = por %p231, %p232
      %s234 = ssub.s32 %s32, %s44
      %s235 = ssub.s32 %s33, %s40
      %s236 = sor.u32 %s234, %s235
      %p237 = scmp.eq.s32.totalorder %s236, 0
      %s239 = sadd.s32 %s238, 1
      %s240 = scalar_select %p237, %s238, %s239
      %p243 = pneg %p237
      %p244 = scmp.eq.s32.totalorder %s25, 1
      %p245 = por %p243, %p244
      %p246 = scmp.ne.s32.totalorder %s238, %s241
      %p247 = scmp.eq.s32.totalorder %s25, 0
      %p248 = por %p246, %p247
      %p249 = scmp.ne.s32.totalorder %s238, %s241
      %p250 = scmp.eq.s32.totalorder %s30, 1
      %p251 = por %p249, %p250
      %p252 = scmp.ne.s32.totalorder %s241, %s242
      %p253 = scmp.eq.s32.totalorder %s30, 0
      %p254 = por %p252, %p253
      %p255 = scmp.ne.s32.totalorder %s241, %s242
      %p256 = scmp.eq.s32.totalorder %s31, 1
      %p257 = por %p255, %p256
      %p259 = scmp.ne.s32.totalorder %s242, %s258
      %p260 = scmp.eq.s32.totalorder %s31, 0
      %p261 = por %p259, %p260
      %s262 = ssub.s32 %s32, %s44
      %s263 = ssub.s32 %s33, %s40
      %s264 = sor.u32 %s262, %s263
      %p265 = scmp.eq.s32.totalorder %s264, 0
      %s267 = sadd.s32 %s266, 1
      %s268 = scalar_select %p265, %s266, %s267
      %p271 = pneg %p265
      %p272 = scmp.eq.s32.totalorder %s25, 1
      %p273 = por %p271, %p272
      %p274 = scmp.ne.s32.totalorder %s266, %s269
      %p275 = scmp.eq.s32.totalorder %s25, 0
      %p276 = por %p274, %p275
      %p277 = scmp.ne.s32.totalorder %s266, %s269
      %p278 = scmp.eq.s32.totalorder %s30, 1
      %p279 = por %p277, %p278
      %p280 = scmp.ne.s32.totalorder %s269, %s270
      %p281 = scmp.eq.s32.totalorder %s30, 0
      %p282 = por %p280, %p281
      %p283 = scmp.ne.s32.totalorder %s269, %s270
      %p284 = scmp.eq.s32.totalorder %s31, 1
      %p285 = por %p283, %p284
      %p287 = scmp.ne.s32.totalorder %s270, %s286
      %p288 = scmp.eq.s32.totalorder %s31, 0
      %p289 = por %p287, %p288
      %s290 = ssub.s32 %s32, %s44
      %s291 = ssub.s32 %s33, %s40
      %s292 = sor.u32 %s290, %s291
      %p293 = scmp.eq.s32.totalorder %s292, 0
      %s295 = sadd.s32 %s294, 1
      %s296 = scalar_select %p293, %s294, %s295
      %p299 = pneg %p293
      %p300 = scmp.eq.s32.totalorder %s25, 1
      %p301 = por %p299, %p300
      %p302 = scmp.ne.s32.totalorder %s294, %s297
      %p303 = scmp.eq.s32.totalorder %s25, 0
      %p304 = por %p302, %p303
      %p305 = scmp.ne.s32.totalorder %s294, %s297
      %p306 = scmp.eq.s32.totalorder %s30, 1
      %p307 = por %p305, %p306
      %p308 = scmp.ne.s32.totalorder %s297, %s298
      %p309 = scmp.eq.s32.totalorder %s30, 0
      %p310 = por %p308, %p309
      %p311 = scmp.ne.s32.totalorder %s297, %s298
      %p312 = scmp.eq.s32.totalorder %s31, 1
      %p313 = por %p311, %p312
      %p315 = scmp.ne.s32.totalorder %s298, %s314
      %p316 = scmp.eq.s32.totalorder %s31, 0
      %p317 = por %p315, %p316
      %p318 = scmp.le.s32.totalorder 1, %s25
      %p319 = scmp.lt.s32.totalorder %s25, 3
      %p320 = pnand %p318, %p319
      %p321 = pneg %p320
      // Predicated region
      $region9: #{tpu_custom_call.1} parent=5 // pred_check
        _
      $region10: #{tpu_custom_call.1} parent=5 // pred_check_branch
        %323 = sbr.rel (%p320) target = $region12
      $region11: #{tpu_custom_call.1} parent=5 // pred_region
        %s324 = ssub.s32 %s25, 1
        // Predicated region
        $region13: #{tpu_custom_call.1} parent=11 // pred_check
          %p325 = pneg %p142
        $region14: #{tpu_custom_call.1} parent=11 // pred_check_branch
          %327 = sbr.rel (%p325) target = $region16
        $region15: #{tpu_custom_call.1} parent=11 // pred_region
          %s329 = ssub.s32 2560, 2560
          %330 = vsyncadd [#allocation4], %s329
          %s331 = sshll.u32 [#allocation3], 4
          %s332 = int_to_ptr.vmem [resolvable:$true] %s331
          %337 = dma.hbm_to_vmem [thread:$0]  %s3, 2560, %s332, [#allocation4], 128, 128, 8
        $region16: #{tpu_custom_call.1} parent=11 // pred_fallthru
          _
        // Predicated region
        $region17: #{tpu_custom_call.1} parent=11 // pred_check
          %p338 = pneg %p163
        $region18: #{tpu_custom_call.1} parent=11 // pred_check_branch
          %340 = sbr.rel (%p338) target = $region20
        $region19: #{tpu_custom_call.1} parent=11 // pred_region
          _
        $region20: #{tpu_custom_call.1} parent=11 // pred_fallthru
          _
        // Predicated region
        $region21: #{tpu_custom_call.1} parent=11 // pred_check
          %p341 = pneg %p184
        $region22: #{tpu_custom_call.1} parent=11 // pred_check_branch
          %343 = sbr.rel (%p341) target = $region24
        $region23: #{tpu_custom_call.1} parent=11 // pred_region
          _
        $region24: #{tpu_custom_call.1} parent=11 // pred_fallthru
          _
        // Predicated region
        $region25: #{tpu_custom_call.1} parent=11 // pred_check
          %p344 = pneg %p205
        $region26: #{tpu_custom_call.1} parent=11 // pred_check_branch
          %346 = sbr.rel (%p344) target = $region28
        $region27: #{tpu_custom_call.1} parent=11 // pred_region
          %s348 = ssub.s32 256, 256
          %349 = vsyncadd [#allocation7], %s348
          %s350 = sshll.u32 [#allocation6], 4
          %s351 = int_to_ptr.vmem [resolvable:$true] %s350
          %356 = dma.hbm_to_vmem [thread:$0]  %s6, 256, %s351, [#allocation7], 64, 64, 4
        $region28: #{tpu_custom_call.1} parent=11 // pred_fallthru
          _
        // Predicated region
        $region29: #{tpu_custom_call.1} parent=11 // pred_check
          %p357 = pneg %p226
        $region30: #{tpu_custom_call.1} parent=11 // pred_check_branch
          %359 = sbr.rel (%p357) target = $region32
        $region31: #{tpu_custom_call.1} parent=11 // pred_region
          _
        $region32: #{tpu_custom_call.1} parent=11 // pred_fallthru
          _
      $region12: #{tpu_custom_call.1} parent=5 // pred_fallthru
        _
      %p360 = scmp.lt.s32.totalorder %s25, 2
      // Predicated region
      $region33: #{tpu_custom_call.1} parent=5 // pred_check
        %p361 = pneg %p360
      $region34: #{tpu_custom_call.1} parent=5 // pred_check_branch
        %363 = sbr.rel (%p361) target = $region36
      $region35: #{tpu_custom_call.1} parent=5 // pred_region
        // Predicated region
        $region37: #{tpu_custom_call.1} parent=35 // pred_check
          %p364 = pneg %p59
        $region38: #{tpu_custom_call.1} parent=35 // pred_check_branch
          %366 = sbr.rel (%p364) target = $region40
        $region39: #{tpu_custom_call.1} parent=35 // pred_region
          %p367 = scmp.lt.s32.totalorder %s32, 0
          %s368 = scalar_select %p367, %s32, 0
          %p369 = scmp.lt.s32.totalorder %s33, 1
          %s370 = scalar_select %p369, %s33, 1
          %s371 = smul.addr %s368, 2
          %s372 = sadd.s32 %s370, %s371
          %s373 = smul.addr %s372, 2
          %s374 = scalar_lea.vmem %s0, %s373
        $region40: #{tpu_custom_call.1} parent=35 // pred_fallthru
          _
        // Predicated region
        $region41: #{tpu_custom_call.1} parent=35 // pred_check
          %p375 = pneg %p87
        $region42: #{tpu_custom_call.1} parent=35 // pred_check_branch
          %377 = sbr.rel (%p375) target = $region44
        $region43: #{tpu_custom_call.1} parent=35 // pred_region
          %p378 = scmp.lt.s32.totalorder %s32, 0
          %s379 = scalar_select %p378, %s32, 0
          %p380 = scmp.lt.s32.totalorder %s33, 1
          %s381 = scalar_select %p380, %s33, 1
          %s382 = smul.addr %s379, 2
          %s383 = sadd.s32 %s381, %s382
          %s384 = smul.addr %s383, 2
          %s385 = scalar_lea.vmem %s1, %s384
        $region44: #{tpu_custom_call.1} parent=35 // pred_fallthru
          _
        // Predicated region
        $region45: #{tpu_custom_call.1} parent=35 // pred_check
          %p386 = pneg %p115
        $region46: #{tpu_custom_call.1} parent=35 // pred_check_branch
          %388 = sbr.rel (%p386) target = $region48
        $region47: #{tpu_custom_call.1} parent=35 // pred_region
          %s389 = smul.u32 4, %s33
          %p390 = scmp.lt.s32.totalorder %s389, 7
          %s391 = scalar_select %p390, %s389, 7
          %p392 = scmp.lt.s32.totalorder %s32, 0
          %s393 = scalar_select %p392, %s32, 0
          %s394 = sadd.s32 %s393, %s391
          %s395 = smul.addr %s394, 2
          %s396 = scalar_lea.vmem %s2, %s395
          %s397 = smul.u32 4, %s33
        $region48: #{tpu_custom_call.1} parent=35 // pred_fallthru
          _
      $region36: #{tpu_custom_call.1} parent=5 // pred_fallthru
        _
      %p398 = scmp.le.s32.totalorder 1, %s25
      %p399 = scmp.lt.s32.totalorder %s25, 3
      %p400 = pnand %p398, %p399
      %p401 = pneg %p400
      // Predicated region
      $region49: #{tpu_custom_call.1} parent=5 // pred_check
        _
      $region50: #{tpu_custom_call.1} parent=5 // pred_check_branch
        %403 = sbr.rel (%p400) target = $region52
      $region51: #{tpu_custom_call.1} parent=5 // pred_region
        %s404 = ssub.s32 %s25, 1
        // Predicated region
        $region53: #{tpu_custom_call.1} parent=51 // pred_check
          %p405 = pneg %p142
        $region54: #{tpu_custom_call.1} parent=51 // pred_check_branch
          %407 = sbr.rel (%p405) target = $region56
        $region55: #{tpu_custom_call.1} parent=51 // pred_region
          %408 = dma.done [#allocation4], 2560
        $region56: #{tpu_custom_call.1} parent=51 // pred_fallthru
          _
        // Predicated region
        $region57: #{tpu_custom_call.1} parent=51 // pred_check
          %p409 = pneg %p205
        $region58: #{tpu_custom_call.1} parent=51 // pred_check_branch
          %411 = sbr.rel (%p409) target = $region60
        $region59: #{tpu_custom_call.1} parent=51 // pred_region
          %412 = dma.done [#allocation7], 256
        $region60: #{tpu_custom_call.1} parent=51 // pred_fallthru
          _
        %p413 = scmp.lt.s32.totalorder %s34, 0
        %s414 = scalar_select %p413, %s34, 0
        %p415 = scmp.lt.s32.totalorder %s35, 1
        %s416 = scalar_select %p415, %s35, 1
        %s417 = smul.addr %s414, 2
        %s418 = sadd.s32 %s416, %s417
        %s419 = smul.addr %s418, 2
        %s420 = scalar_lea.vmem %s0, %s419
        %p421 = pneg %p65
        %p422 = pneg %p62
        %p423 = scmp.lt.s32.totalorder %s34, 0
        %s424 = scalar_select %p423, %s34, 0
        %p425 = scmp.lt.s32.totalorder %s35, 1
        %s426 = scalar_select %p425, %s35, 1
        %s427 = smul.addr %s424, 2
        %s428 = sadd.s32 %s426, %s427
        %s429 = smul.addr %s428, 2
        %s430 = scalar_lea.vmem %s1, %s429
        %p431 = pneg %p93
        %p432 = pneg %p90
        %s433 = smul.u32 4, %s35
        %p434 = scmp.lt.s32.totalorder %s433, 7
        %s435 = scalar_select %p434, %s433, 7
        %p436 = scmp.lt.s32.totalorder %s34, 0
        %s437 = scalar_select %p436, %s34, 0
        %s438 = sadd.s32 %s437, %s435
        %s439 = smul.addr %s438, 2
        %s440 = scalar_lea.vmem %s2, %s439
        %p441 = pneg %p121
        %p442 = pneg %p118
        %p443 = pneg %p142
        %p444 = pneg %p139
        %p445 = pneg %p163
        %p446 = pneg %p160
        %p447 = pneg %p184
        %p448 = pneg %p181
        %p449 = pneg %p205
        %p450 = pneg %p202
        %p451 = pneg %p226
        %p452 = pneg %p223
        %p453 = pneg %p254
        %p454 = pneg %p251
        %s455 = sand.u32 %s241, 1
        %s456 = scalar_lea.sflag [#allocation5], %s455
        %s457 = sand.u32 %s241, 1
        %s458 = smul.addr %s457, 2
        %s459 = scalar_lea.vmem [#allocation8], %s458
        %p460 = pneg %p282
        %p461 = pneg %p279
        %s462 = sand.u32 %s30, 1
        %s463 = scalar_lea.sflag [#allocation10], %s462
        %s464 = sand.u32 %s269, 1
        %s465 = smul.addr %s464, 2
        %s466 = scalar_lea.vmem [#allocation9], %s465
        %p467 = pneg %p310
        %p468 = pneg %p307
        %s469 = sand.u32 %s30, 1
        %s470 = scalar_lea.sflag [#allocation10], %s469
        %s471 = sand.u32 %s297, 1
        %s472 = smul.addr %s471, 2
        %s473 = scalar_lea.vmem [#allocation11], %s472
        %p474 = scmp.lt.s32.totalorder %s34, 0
        %s475 = scalar_select %p474, %s34, 0
        %p476 = scmp.lt.s32.totalorder %s35, 1
        %s477 = scalar_select %p476, %s35, 1
        %s478 = smul.addr %s475, 2
        %s479 = sadd.s32 %s477, %s478
        %s480 = smul.addr %s479, 2
        %s481 = scalar_lea.vmem %s0, %s480
        %p482 = scmp.lt.s32.totalorder %s34, 0
        %s483 = scalar_select %p482, %s34, 0
        %p484 = scmp.lt.s32.totalorder %s35, 1
        %s485 = scalar_select %p484, %s35, 1
        %s486 = smul.addr %s483, 2
        %s487 = sadd.s32 %s485, %s486
        %s488 = smul.addr %s487, 2
        %s489 = scalar_lea.vmem %s1, %s488
        %s490 = smul.u32 4, %s35
        %p491 = scmp.lt.s32.totalorder %s490, 7
        %s492 = scalar_select %p491, %s490, 7
        %p493 = scmp.lt.s32.totalorder %s34, 0
        %s494 = scalar_select %p493, %s34, 0
        %s495 = sadd.s32 %s494, %s492
        %s496 = smul.addr %s495, 2
        %s497 = scalar_lea.vmem %s2, %s496
        %s498 = smul.u32 4, %s35
        %p500 = scmp.eq.s32.totalorder %s35, 0
        // Predicated region
        $region61: #{tpu_custom_call.1} parent=51 // pred_check
          %p501 = pneg %p500
        $region62: #{tpu_custom_call.1} parent=51 // pred_check_branch
          %503 = sbr.rel (%p501) target = $region64
        $region63: #{tpu_custom_call.1} parent=51 // pred_region
          %vm504 = vcmask 779264
          %505 = vst.msk [vmem:[#allocation2] sm:$0x3] %vm504, 0.0
        $region64: #{tpu_custom_call.1} parent=51 // pred_fallthru
          _
        %v506 = vld [vmem:[#allocation3] sm:$0xff]
        %v507 = vld [vmem:[#allocation3 + $0x8] sm:$0xff]
        %v508 = vld [vmem:[#allocation3 + $0x10] sm:$0xff]
        %v509 = vld [vmem:[#allocation3 + $0x18] sm:$0xff]
        %v510 = vld [vmem:[#allocation3 + $0x20] sm:$0xff]
        %v511 = vld [vmem:[#allocation3 + $0x28] sm:$0xff]
        %v512 = vld [vmem:[#allocation3 + $0x30] sm:$0xff]
        %v513 = vld [vmem:[#allocation3 + $0x38] sm:$0xff]
        %v514 = vld [vmem:[#allocation3 + $0x40] sm:$0xff]
        %v515 = vld [vmem:[#allocation3 + $0x48] sm:$0xff]
        %v516 = vld [vmem:[#allocation3 + $0x50] sm:$0xff]
        %v517 = vld [vmem:[#allocation3 + $0x58] sm:$0xff]
        %v518 = vld [vmem:[#allocation3 + $0x60] sm:$0xff]
        %v519 = vld [vmem:[#allocation3 + $0x68] sm:$0xff]
        %v520 = vld [vmem:[#allocation3 + $0x70] sm:$0xff]
        %v521 = vld [vmem:[#allocation3 + $0x78] sm:$0xff]
        %v522 = vld [vmem:[#allocation3 + $0x80] sm:$0xff]
        %v523 = vld [vmem:[#allocation3 + $0x88] sm:$0xff]
        %v524 = vld [vmem:[#allocation3 + $0x90] sm:$0xff]
        %v525 = vld [vmem:[#allocation3 + $0x98] sm:$0xff]
        %v526 = vld [vmem:[%s5] sm:$0xf]
        %v527 = vld [vmem:[%s5 + $0x4] sm:$0xf]
        %v528 = vld [vmem:[%s5 + $0x8] sm:$0xf]
        %v529 = vld [vmem:[%s5 + $0xc] sm:$0xf]
        %v530 = vld [vmem:[#allocation6] sm:$0xf]
        %v531 = vld [vmem:[#allocation6 + $0x4] sm:$0xf]
        %v532 = vld [vmem:[#allocation6 + $0x8] sm:$0xf]
        %v533 = vld [vmem:[#allocation6 + $0xc] sm:$0xf]
        %v534 = vld [vmem:[%s4] sm:$0x3]
        %v536 = vlaneseq
        %v537 = vshrl.u32 %v536, 7
        %v538 = vsub.s32 0, %v537
        %v539 = vrot.slane %v534, %v538
        %v540 = vlaneseq
        %v541 = vshrl.u32 %v540, 7
        %v542 = vsub.s32 1, %v541
        %v543 = vrot.slane %v534, %v542
        %v546 = vld [vmem:[%s7] sm:$0x1]
        %v548 = vlaneseq
        %v549 = vshrl.u32 %v548, 7
        %v550 = vsub.s32 0, %v549
        %v551 = vrot.slane %v546, %v550
        %v553 = vld [vmem:[%s481] sm:$0x3]
        %v554 = vld [vmem:[%s489] sm:$0x3]
        %v555 = vld [vmem:[%s497] sm:$0x3]
        %v556 = vld [vmem:[%s497 + $0x2] sm:$0x3]
        %v557 = vld [vmem:[%s497 + $0x4] sm:$0x3]
        %v558 = vld [vmem:[%s497 + $0x6] sm:$0x3]
        %v559 = vsub.f32 1.0, %v555
        %v560 = vsub.f32 1.0, %v556
        %v561 = vsub.f32 1.0, %v557
        %v562 = vsub.f32 1.0, %v558
        %v563 = vmax.f32 %v559, 1e-08
        %v564 = vmax.f32 %v560, 1e-08
        %v565 = vmax.f32 %v561, 1e-08
        %v566 = vmax.f32 %v562, 1e-08
        %v567 = vrsqrt.pop %v563
        %v568 = vmul.f32 %v563, %v567
        %vm569 = vcmp.eq.f32.partialorder %v563, inf
        %v570 = vsel %vm569, %v563, %v568
        %vm571 = vcmp.eq.f32.partialorder %v563, 0.0
        %v572 = vand.u32 %v563, 2147483648
        %v573 = vsel %vm571, %v572, %v570
        %v574 = vrsqrt.pop %v564
        %v575 = vmul.f32 %v564, %v574
        %vm576 = vcmp.eq.f32.partialorder %v564, inf
        %v577 = vsel %vm576, %v564, %v575
        %vm578 = vcmp.eq.f32.partialorder %v564, 0.0
        %v579 = vand.u32 %v564, 2147483648
        %v580 = vsel %vm578, %v579, %v577
        %v581 = vrsqrt.pop %v565
        %v582 = vmul.f32 %v565, %v581
        %vm583 = vcmp.eq.f32.partialorder %v565, inf
        %v584 = vsel %vm583, %v565, %v582
        %vm585 = vcmp.eq.f32.partialorder %v565, 0.0
        %v586 = vand.u32 %v565, 2147483648
        %v587 = vsel %vm585, %v586, %v584
        %v588 = vrsqrt.pop %v566
        %v589 = vmul.f32 %v566, %v588
        %vm590 = vcmp.eq.f32.partialorder %v566, inf
        %v591 = vsel %vm590, %v566, %v589
        %vm592 = vcmp.eq.f32.partialorder %v566, 0.0
        %v593 = vand.u32 %v566, 2147483648
        %v594 = vsel %vm592, %v593, %v591
        %v595 = vmax.f32 %v555, 1e-08
        %v596 = vmax.f32 %v556, 1e-08
        %v597 = vmax.f32 %v557, 1e-08
        %v598 = vmax.f32 %v558, 1e-08
        %v599 = vrsqrt.pop %v595
        %v600 = vrsqrt.pop %v596
        %v601 = vrsqrt.pop %v597
        %v602 = vrsqrt.pop %v598
        %v603 = vld [vmem:[#allocation2] sm:$0x3]
        %605 = vrot.lane.b32.xlu0 %v553, 96
        %v606 = vpop.permute.xlu0 %605
        %vm608 = vcmask 785408
        %v609 = vsel %vm608, %v603, %v606
        %v610 = vpack.c.bf16 %v609, %v609
        %v611 = vpack.c.bf16 %v554, %v554
        %v632 = vunpack.c.l.b16 %v506
        %v633 = vunpack.c.h.b16 %v506
        %v634 = vunpack.c.l.b16 %v507
        %v635 = vunpack.c.h.b16 %v507
        %v636 = vunpack.c.l.b16 %v508
        %v637 = vunpack.c.h.b16 %v508
        %v638 = vunpack.c.l.b16 %v509
        %v639 = vunpack.c.h.b16 %v509
        %v640 = vunpack.c.l.b16 %v510
        %v641 = vunpack.c.h.b16 %v510
        %v642 = vunpack.c.l.b16 %v511
        %v643 = vunpack.c.h.b16 %v511
        %v644 = vunpack.c.l.b16 %v512
        %v645 = vunpack.c.h.b16 %v512
        %v646 = vunpack.c.l.b16 %v513
        %v647 = vunpack.c.h.b16 %v513
        %v648 = vunpack.c.l.b16 %v514
        %v649 = vunpack.c.h.b16 %v514
        %v650 = vunpack.c.l.b16 %v515
        %v651 = vunpack.c.h.b16 %v515
        %v652 = vunpack.c.l.b16 %v516
        %v653 = vunpack.c.h.b16 %v516
        %v654 = vunpack.c.l.b16 %v517
        %v655 = vunpack.c.h.b16 %v517
        %v656 = vunpack.c.l.b16 %v518
        %v657 = vunpack.c.h.b16 %v518
        %v658 = vunpack.c.l.b16 %v519
        %v659 = vunpack.c.h.b16 %v519
        %v660 = vunpack.c.l.b16 %v520
        %v661 = vunpack.c.h.b16 %v520
        %v662 = vunpack.c.l.b16 %v521
        %v663 = vunpack.c.h.b16 %v521
        %v664 = vunpack.c.l.b16 %v522
        %v665 = vunpack.c.h.b16 %v522
        %v666 = vunpack.c.l.b16 %v523
        %v667 = vunpack.c.h.b16 %v523
        %v668 = vunpack.c.l.b16 %v524
        %v669 = vunpack.c.h.b16 %v524
        %v670 = vunpack.c.l.b16 %v525
        %v671 = vunpack.c.h.b16 %v525
        %v672 = vpack.c.b16 %v634, %v632
        %v673 = vpack.c.b16 %v635, %v633
        %v674 = vpack.c.b16 %v638, %v636
        %v675 = vpack.c.b16 %v639, %v637
        %v676 = vpack.c.b16 %v642, %v640
        %v677 = vpack.c.b16 %v643, %v641
        %v678 = vpack.c.b16 %v646, %v644
        %v679 = vpack.c.b16 %v647, %v645
        %v680 = vpack.c.b16 %v650, %v648
        %v681 = vpack.c.b16 %v651, %v649
        %v682 = vpack.c.b16 %v654, %v652
        %v683 = vpack.c.b16 %v655, %v653
        %v684 = vpack.c.b16 %v658, %v656
        %v685 = vpack.c.b16 %v659, %v657
        %v686 = vpack.c.b16 %v662, %v660
        %v687 = vpack.c.b16 %v663, %v661
        %v688 = vpack.c.b16 %v666, %v664
        %v689 = vpack.c.b16 %v667, %v665
        %v690 = vpack.c.b16 %v670, %v668
        %v691 = vpack.c.b16 %v671, %v669
        %vm712 = vcmask 261120
        %v714 = vsel %vm712, %v611, 0
        %716 = vmatprep.subr.bf16.mxu0 %v687
        %717 = vmatpush1.bf16.msra.mxu0 %v686
        %718 = vmatprep.subr.bf16.mxu0 %v685
        %719 = vmatpush1.bf16.msra.mxu0 %v684
        %720 = vmatprep.subr.bf16.mxu0 %v683
        %721 = vmatpush1.bf16.msra.mxu0 %v682
        %722 = vmatprep.subr.bf16.mxu0 %v681
        %723 = vmatpush1.bf16.msra.mxu0 %v680
        %724 = vmatprep.subr.bf16.mxu0 %v679
        %725 = vmatpush1.bf16.msra.mxu0 %v678
        %726 = vmatprep.subr.bf16.mxu0 %v677
        %727 = vmatpush1.bf16.msra.mxu0 %v676
        %728 = vmatprep.subr.bf16.mxu0 %v675
        %729 = vmatpush1.bf16.msra.mxu0 %v674
        %730 = vmatprep.subr.bf16.mxu0 %v673
        %731 = vmatpush1.bf16.msra.mxu0 %v672
        %732 = vmatprep.subr.bf16.mxu0 0
        %733 = vmatpush2.bf16.msra.mxu0 0
        %734 = vmatprep.subr.bf16.mxu0 0
        %735 = vmatpush2.bf16.msra.mxu0 0
        %736 = vmatprep.subr.bf16.mxu0 0
        %737 = vmatpush2.bf16.msra.mxu0 0
        %738 = vmatprep.subr.bf16.mxu0 0
        %739 = vmatpush2.bf16.msra.mxu0 0
        %740 = vmatprep.subr.bf16.mxu0 0
        %741 = vmatpush2.bf16.msra.mxu0 0
        %742 = vmatprep.subr.bf16.mxu0 0
        %743 = vmatpush2.bf16.msra.mxu0 0
        %744 = vmatprep.subr.bf16.mxu0 %v691
        %745 = vmatpush2.bf16.msra.mxu0 %v690
        %746 = vmatprep.subr.bf16.mxu0 %v689
        %747 = vmatpush2.bf16.msra.mxu0 %v688
        %748 = vmatprep.mubr.bf16.mxu0 %v714
        %749 = vmatmul.mubr.bf16.gmra.mxu0 %v610
        %v750 = vpop.f32.mrf.mxu0
        %v751 = vadd.f32 %v539, %v750
        %v752 = vpop.f32.mrf.mxu0
        %v753 = vadd.f32 %v543, %v752
        %v754 = vpop.f32.mrf.mxu0
        %v755 = vpop.f32.mrf.mxu0
        %756 = vdwg.mxu0
        %v757 = vtanh.pop %v751
        %v758 = vpack.c.bf16 %v757, %v757
        %v763 = vunpack.c.l.b16 %v526
        %v764 = vunpack.c.l.b16 %v527
        %v765 = vunpack.c.l.b16 %v528
        %v766 = vunpack.c.l.b16 %v529
        %v767 = vpack.c.b16 %v764, %v763
        %v768 = vpack.c.b16 %v766, %v765
        %772 = vrot.lane.b32.xlu0 %v751, 96
        %v773 = vpop.permute.xlu0 %772
        %v776 = vsel %vm712, %v758, 0
        %778 = vmatprep.subr.bf16.mxu0 0
        %779 = vmatpush1.bf16.msra.mxu0 0
        %780 = vmatprep.subr.bf16.mxu0 0
        %781 = vmatpush1.bf16.msra.mxu0 0
        %782 = vmatprep.subr.bf16.mxu0 0
        %783 = vmatpush1.bf16.msra.mxu0 0
        %784 = vmatprep.subr.bf16.mxu0 0
        %785 = vmatpush1.bf16.msra.mxu0 0
        %786 = vmatprep.subr.bf16.mxu0 0
        %787 = vmatpush1.bf16.msra.mxu0 0
        %788 = vmatprep.subr.bf16.mxu0 0
        %789 = vmatpush1.bf16.msra.mxu0 0
        %790 = vmatprep.subr.bf16.mxu0 0
        %791 = vmatpush1.bf16.msra.mxu0 %v768
        %792 = vmatprep.subr.bf16.mxu0 0
        %793 = vmatpush1.bf16.msra.mxu0 %v767
        %794 = vmatprep.subr.bf16.mxu0 0
        %795 = vmatpush2.bf16.msra.mxu0 0
        %796 = vmatprep.subr.bf16.mxu0 0
        %797 = vmatpush2.bf16.msra.mxu0 0
        %798 = vmatprep.subr.bf16.mxu0 0
        %799 = vmatpush2.bf16.msra.mxu0 0
        %800 = vmatprep.subr.bf16.mxu0 0
        %801 = vmatpush2.bf16.msra.mxu0 0
        %802 = vmatprep.subr.bf16.mxu0 0
        %803 = vmatpush2.bf16.msra.mxu0 0
        %804 = vmatprep.subr.bf16.mxu0 0
        %805 = vmatpush2.bf16.msra.mxu0 0
        %806 = vmatprep.subr.bf16.mxu0 0
        %807 = vmatpush2.bf16.msra.mxu0 0
        %808 = vmatprep.subr.bf16.mxu0 0
        %809 = vmatpush2.bf16.msra.mxu0 0
        %810 = vmatprep.mubr.bf16.mxu0 0
        %811 = vmatmul.mubr.bf16.gmra.mxu0 %v776
        %v812 = vpop.f32.mrf.mxu0
        %v813 = vadd.f32 %v773, %v812
        %v814 = vpop.f32.mrf.mxu0
        %v815 = vpop.f32.mrf.mxu0
        %v816 = vpop.f32.mrf.mxu0
        %817 = vdwg.mxu0
        %v818 = vtanh.pop %v813
        %v819 = vpack.c.bf16 %v818, %v818
        %v824 = vunpack.c.l.b16 %v530
        %v825 = vunpack.c.l.b16 %v531
        %v826 = vunpack.c.l.b16 %v532
        %v827 = vunpack.c.l.b16 %v533
        %v828 = vpack.c.b16 %v825, %v824
        %v829 = vpack.c.b16 %v827, %v826
        %v833 = vsel %vm712, %v819, 0
        %835 = vmatprep.subr.bf16.mxu0 0
        %836 = vmatpush1.bf16.msra.mxu0 0
        %837 = vmatprep.subr.bf16.mxu0 0
        %838 = vmatpush1.bf16.msra.mxu0 0
        %839 = vmatprep.subr.bf16.mxu0 0
        %840 = vmatpush1.bf16.msra.mxu0 0
        %841 = vmatprep.subr.bf16.mxu0 0
        %842 = vmatpush1.bf16.msra.mxu0 0
        %843 = vmatprep.subr.bf16.mxu0 0
        %844 = vmatpush1.bf16.msra.mxu0 0
        %845 = vmatprep.subr.bf16.mxu0 0
        %846 = vmatpush1.bf16.msra.mxu0 0
        %847 = vmatprep.subr.bf16.mxu0 0
        %848 = vmatpush1.bf16.msra.mxu0 %v829
        %849 = vmatprep.subr.bf16.mxu0 0
        %850 = vmatpush1.bf16.msra.mxu0 %v828
        %851 = vmatprep.subr.bf16.mxu0 0
        %852 = vmatpush2.bf16.msra.mxu0 0
        %853 = vmatprep.subr.bf16.mxu0 0
        %854 = vmatpush2.bf16.msra.mxu0 0
        %855 = vmatprep.subr.bf16.mxu0 0
        %856 = vmatpush2.bf16.msra.mxu0 0
        %857 = vmatprep.subr.bf16.mxu0 0
        %858 = vmatpush2.bf16.msra.mxu0 0
        %859 = vmatprep.subr.bf16.mxu0 0
        %860 = vmatpush2.bf16.msra.mxu0 0
        %861 = vmatprep.subr.bf16.mxu0 0
        %862 = vmatpush2.bf16.msra.mxu0 0
        %863 = vmatprep.subr.bf16.mxu0 0
        %864 = vmatpush2.bf16.msra.mxu0 0
        %865 = vmatprep.subr.bf16.mxu0 0
        %866 = vmatpush2.bf16.msra.mxu0 0
        %867 = vmatprep.mubr.bf16.mxu0 0
        %868 = vmatmul.mubr.bf16.gmra.mxu0 %v833
        %v869 = vpop.f32.mrf.mxu0
        %v870 = vadd.f32 %v551, %v869
        %v871 = vpop.f32.mrf.mxu0
        %v872 = vpop.f32.mrf.mxu0
        %v873 = vpop.f32.mrf.mxu0
        %874 = vdwg.mxu0
        %875 = vrot.lane.b32.xlu0 %v751, 64
        %v876 = vpop.permute.xlu0 %875
        %v878 = vadd.f32 %v870, %v876
        %v879 = vxor.u32 %v878, 2147483648
        %v880 = vmul.f32 %v879, 1.442695
        %v881 = vpow.pop %v880
        %v882 = vadd.f32 %v881, 1.0
        %v883 = vrcp.pop %v882
        %v884 = vmul.f32 1.0, %v883
        %v885 = vmul.f32 %v884, %v753
        %887 = vrot.lane.b32.xlu0 %v885, 64
        %v888 = vpop.permute.xlu0 %887
        %v890 = vadd.f32 %v870, %v888
        %v891 = vtanh.pop %v890
        %v892 = vsub.f32 1.0, %v884
        %894 = vrot.lane.b32.xlu0 %v891, 96
        %v895 = vpop.permute.xlu0 %894
        %v897 = vmul.f32 %v892, %v895
        %899 = vrot.lane.b32.xlu0 %v603, 96
        %v900 = vpop.permute.xlu0 %899
        %v902 = vmul.f32 %v884, %v900
        %v903 = vadd.f32 %v897, %v902
        %905 = vset.pattern.permute.xlu0 0
        %906 = vperm.xlu0 %905, %v573
        %v907 = vpop.permute.xlu0 %906
        %v909 = vmul.f32 %v907, %v818
        %v910 = vsub.f32 %v554, %v909
        %912 = vset.pattern.permute.xlu0 0
        %913 = vperm.xlu0 %912, %v599
        %v914 = vpop.permute.xlu0 %913
        %v916 = vmul.f32 %v910, %v914
        %918 = vrot.lane.b32.xlu0 %v818, 32
        %v919 = vpop.permute.xlu0 %918
        %922 = vrot.lane.b32.xlu0 %v903, 32
        %v923 = vpop.permute.xlu0 %922
        %v925 = vsel %vm712, %v757, %v919
        %vm926 = vcmask 523264
        %v927 = vsel %vm926, %v925, %v923
        %928 = vrot.lane.b32.xlu0 %v553, 64
        %v929 = vpop.permute.xlu0 %928
        %932 = vrot.lane.b32.xlu0 %v554, 96
        %v933 = vpop.permute.xlu0 %932
        %v935 = vsel %vm608, %v927, %v929
        %v936 = vpack.c.bf16 %v935, %v935
        %v937 = vpack.c.bf16 %v933, %v933
        %v939 = vsel %vm712, %v937, 0
        %941 = vmatprep.subr.bf16.mxu0 %v687
        %942 = vmatpush1.bf16.msra.mxu0 %v686
        %943 = vmatprep.subr.bf16.mxu0 %v685
        %944 = vmatpush1.bf16.msra.mxu0 %v684
        %945 = vmatprep.subr.bf16.mxu0 %v683
        %946 = vmatpush1.bf16.msra.mxu0 %v682
        %947 = vmatprep.subr.bf16.mxu0 %v681
        %948 = vmatpush1.bf16.msra.mxu0 %v680
        %949 = vmatprep.subr.bf16.mxu0 %v679
        %950 = vmatpush1.bf16.msra.mxu0 %v678
        %951 = vmatprep.subr.bf16.mxu0 %v677
        %952 = vmatpush1.bf16.msra.mxu0 %v676
        %953 = vmatprep.subr.bf16.mxu0 %v675
        %954 = vmatpush1.bf16.msra.mxu0 %v674
        %955 = vmatprep.subr.bf16.mxu0 %v673
        %956 = vmatpush1.bf16.msra.mxu0 %v672
        %957 = vmatprep.subr.bf16.mxu0 0
        %958 = vmatpush2.bf16.msra.mxu0 0
        %959 = vmatprep.subr.bf16.mxu0 0
        %960 = vmatpush2.bf16.msra.mxu0 0
        %961 = vmatprep.subr.bf16.mxu0 0
        %962 = vmatpush2.bf16.msra.mxu0 0
        %963 = vmatprep.subr.bf16.mxu0 0
        %964 = vmatpush2.bf16.msra.mxu0 0
        %965 = vmatprep.subr.bf16.mxu0 0
        %966 = vmatpush2.bf16.msra.mxu0 0
        %967 = vmatprep.subr.bf16.mxu0 0
        %968 = vmatpush2.bf16.msra.mxu0 0
        %969 = vmatprep.subr.bf16.mxu0 %v691
        %970 = vmatpush2.bf16.msra.mxu0 %v690
        %971 = vmatprep.subr.bf16.mxu0 %v689
        %972 = vmatpush2.bf16.msra.mxu0 %v688
        %973 = vmatprep.mubr.bf16.mxu0 %v939
        %974 = vmatmul.mubr.bf16.gmra.mxu0 %v936
        %v975 = vpop.f32.mrf.mxu0
        %v976 = vadd.f32 %v539, %v975
        %v977 = vpop.f32.mrf.mxu0
        %v978 = vadd.f32 %v543, %v977
        %v979 = vpop.f32.mrf.mxu0
        %v980 = vpop.f32.mrf.mxu0
        %981 = vdwg.mxu0
        %v982 = vtanh.pop %v976
        %v983 = vpack.c.bf16 %v982, %v982
        %985 = vrot.lane.b32.xlu0 %v976, 96
        %v986 = vpop.permute.xlu0 %985
        %v989 = vsel %vm712, %v983, 0
        %991 = vmatprep.subr.bf16.mxu0 0
        %992 = vmatpush1.bf16.msra.mxu0 0
        %993 = vmatprep.subr.bf16.mxu0 0
        %994 = vmatpush1.bf16.msra.mxu0 0
        %995 = vmatprep.subr.bf16.mxu0 0
        %996 = vmatpush1.bf16.msra.mxu0 0
        %997 = vmatprep.subr.bf16.mxu0 0
        %998 = vmatpush1.bf16.msra.mxu0 0
        %999 = vmatprep.subr.bf16.mxu0 0
        %1000 = vmatpush1.bf16.msra.mxu0 0
        %1001 = vmatprep.subr.bf16.mxu0 0
        %1002 = vmatpush1.bf16.msra.mxu0 0
        %1003 = vmatprep.subr.bf16.mxu0 0
        %1004 = vmatpush1.bf16.msra.mxu0 %v768
        %1005 = vmatprep.subr.bf16.mxu0 0
        %1006 = vmatpush1.bf16.msra.mxu0 %v767
        %1007 = vmatprep.subr.bf16.mxu0 0
        %1008 = vmatpush2.bf16.msra.mxu0 0
        %1009 = vmatprep.subr.bf16.mxu0 0
        %1010 = vmatpush2.bf16.msra.mxu0 0
        %1011 = vmatprep.subr.bf16.mxu0 0
        %1012 = vmatpush2.bf16.msra.mxu0 0
        %1013 = vmatprep.subr.bf16.mxu0 0
        %1014 = vmatpush2.bf16.msra.mxu0 0
        %1015 = vmatprep.subr.bf16.mxu0 0
        %1016 = vmatpush2.bf16.msra.mxu0 0
        %1017 = vmatprep.subr.bf16.mxu0 0
        %1018 = vmatpush2.bf16.msra.mxu0 0
        %1019 = vmatprep.subr.bf16.mxu0 0
        %1020 = vmatpush2.bf16.msra.mxu0 0
        %1021 = vmatprep.subr.bf16.mxu0 0
        %1022 = vmatpush2.bf16.msra.mxu0 0
        %1023 = vmatprep.mubr.bf16.mxu0 0
        %1024 = vmatmul.mubr.bf16.gmra.mxu0 %v989
        %v1025 = vpop.f32.mrf.mxu0
        %v1026 = vadd.f32 %v986, %v1025
        %v1027 = vpop.f32.mrf.mxu0
        %v1028 = vpop.f32.mrf.mxu0
        %v1029 = vpop.f32.mrf.mxu0
        %1030 = vdwg.mxu0
        %v1031 = vtanh.pop %v1026
        %v1032 = vpack.c.bf16 %v1031, %v1031
        %v1034 = vsel %vm712, %v1032, 0
        %1036 = vmatprep.subr.bf16.mxu0 0
        %1037 = vmatpush1.bf16.msra.mxu0 0
        %1038 = vmatprep.subr.bf16.mxu0 0
        %1039 = vmatpush1.bf16.msra.mxu0 0
        %1040 = vmatprep.subr.bf16.mxu0 0
        %1041 = vmatpush1.bf16.msra.mxu0 0
        %1042 = vmatprep.subr.bf16.mxu0 0
        %1043 = vmatpush1.bf16.msra.mxu0 0
        %1044 = vmatprep.subr.bf16.mxu0 0
        %1045 = vmatpush1.bf16.msra.mxu0 0
        %1046 = vmatprep.subr.bf16.mxu0 0
        %1047 = vmatpush1.bf16.msra.mxu0 0
        %1048 = vmatprep.subr.bf16.mxu0 0
        %1049 = vmatpush1.bf16.msra.mxu0 %v829
        %1050 = vmatprep.subr.bf16.mxu0 0
        %1051 = vmatpush1.bf16.msra.mxu0 %v828
        %1052 = vmatprep.subr.bf16.mxu0 0
        %1053 = vmatpush2.bf16.msra.mxu0 0
        %1054 = vmatprep.subr.bf16.mxu0 0
        %1055 = vmatpush2.bf16.msra.mxu0 0
        %1056 = vmatprep.subr.bf16.mxu0 0
        %1057 = vmatpush2.bf16.msra.mxu0 0
        %1058 = vmatprep.subr.bf16.mxu0 0
        %1059 = vmatpush2.bf16.msra.mxu0 0
        %1060 = vmatprep.subr.bf16.mxu0 0
        %1061 = vmatpush2.bf16.msra.mxu0 0
        %1062 = vmatprep.subr.bf16.mxu0 0
        %1063 = vmatpush2.bf16.msra.mxu0 0
        %1064 = vmatprep.subr.bf16.mxu0 0
        %1065 = vmatpush2.bf16.msra.mxu0 0
        %1066 = vmatprep.subr.bf16.mxu0 0
        %1067 = vmatpush2.bf16.msra.mxu0 0
        %1068 = vmatprep.mubr.bf16.mxu0 0
        %1069 = vmatmul.mubr.bf16.gmra.mxu0 %v1034
        %v1070 = vpop.f32.mrf.mxu0
        %v1071 = vadd.f32 %v551, %v1070
        %v1072 = vpop.f32.mrf.mxu0
        %v1073 = vpop.f32.mrf.mxu0
        %v1074 = vpop.f32.mrf.mxu0
        %1075 = vdwg.mxu0
        %1076 = vrot.lane.b32.xlu0 %v976, 64
        %v1077 = vpop.permute.xlu0 %1076
        %v1079 = vadd.f32 %v1071, %v1077
        %v1080 = vxor.u32 %v1079, 2147483648
        %v1081 = vmul.f32 %v1080, 1.442695
        %v1082 = vpow.pop %v1081
        %v1083 = vadd.f32 %v1082, 1.0
        %v1084 = vrcp.pop %v1083
        %v1085 = vmul.f32 1.0, %v1084
        %v1086 = vmul.f32 %v1085, %v978
        %1088 = vrot.lane.b32.xlu0 %v1086, 64
        %v1089 = vpop.permute.xlu0 %1088
        %v1091 = vadd.f32 %v1071, %v1089
        %v1092 = vtanh.pop %v1091
        %v1093 = vsub.f32 1.0, %v1085
        %1095 = vrot.lane.b32.xlu0 %v1092, 96
        %v1096 = vpop.permute.xlu0 %1095
        %v1098 = vmul.f32 %v1093, %v1096
        %1100 = vrot.lane.b32.xlu0 %v927, 96
        %v1101 = vpop.permute.xlu0 %1100
        %v1103 = vmul.f32 %v1085, %v1101
        %v1104 = vadd.f32 %v1098, %v1103
        %1106 = vset.pattern.permute.xlu0 0
        %1107 = vperm.xlu0 %1106, %v580
        %v1108 = vpop.permute.xlu0 %1107
        %v1110 = vmul.f32 %v1108, %v1031
        %1112 = vrot.lane.b32.xlu0 %v1110, 32
        %v1113 = vpop.permute.xlu0 %1112
        %v1115 = vsub.f32 %v554, %v1113
        %1117 = vset.pattern.permute.xlu0 0
        %1118 = vperm.xlu0 %1117, %v600
        %v1119 = vpop.permute.xlu0 %1118
        %v1121 = vmul.f32 %v1115, %v1119
        %1123 = vrot.lane.b32.xlu0 %v1031, 32
        %v1124 = vpop.permute.xlu0 %1123
        %1127 = vrot.lane.b32.xlu0 %v1104, 32
        %v1128 = vpop.permute.xlu0 %1127
        %v1130 = vsel %vm712, %v982, %v1124
        %v1131 = vsel %vm926, %v1130, %v1128
        %1132 = vrot.lane.b32.xlu0 %v553, 32
        %v1133 = vpop.permute.xlu0 %1132
        %1135 = vrot.lane.b32.xlu0 %v554, 64
        %v1136 = vpop.permute.xlu0 %1135
        %v1138 = vsel %vm608, %v1131, %v1133
        %v1139 = vpack.c.bf16 %v1138, %v1138
        %v1140 = vpack.c.bf16 %v1136, %v1136
        %v1142 = vsel %vm712, %v1140, 0
        %1144 = vmatprep.subr.bf16.mxu0 %v687
        %1145 = vmatpush1.bf16.msra.mxu0 %v686
        %1146 = vmatprep.subr.bf16.mxu0 %v685
        %1147 = vmatpush1.bf16.msra.mxu0 %v684
        %1148 = vmatprep.subr.bf16.mxu0 %v683
        %1149 = vmatpush1.bf16.msra.mxu0 %v682
        %1150 = vmatprep.subr.bf16.mxu0 %v681
        %1151 = vmatpush1.bf16.msra.mxu0 %v680
        %1152 = vmatprep.subr.bf16.mxu0 %v679
        %1153 = vmatpush1.bf16.msra.mxu0 %v678
        %1154 = vmatprep.subr.bf16.mxu0 %v677
        %1155 = vmatpush1.bf16.msra.mxu0 %v676
        %1156 = vmatprep.subr.bf16.mxu0 %v675
        %1157 = vmatpush1.bf16.msra.mxu0 %v674
        %1158 = vmatprep.subr.bf16.mxu0 %v673
        %1159 = vmatpush1.bf16.msra.mxu0 %v672
        %1160 = vmatprep.subr.bf16.mxu0 0
        %1161 = vmatpush2.bf16.msra.mxu0 0
        %1162 = vmatprep.subr.bf16.mxu0 0
        %1163 = vmatpush2.bf16.msra.mxu0 0
        %1164 = vmatprep.subr.bf16.mxu0 0
        %1165 = vmatpush2.bf16.msra.mxu0 0
        %1166 = vmatprep.subr.bf16.mxu0 0
        %1167 = vmatpush2.bf16.msra.mxu0 0
        %1168 = vmatprep.subr.bf16.mxu0 0
        %1169 = vmatpush2.bf16.msra.mxu0 0
        %1170 = vmatprep.subr.bf16.mxu0 0
        %1171 = vmatpush2.bf16.msra.mxu0 0
        %1172 = vmatprep.subr.bf16.mxu0 %v691
        %1173 = vmatpush2.bf16.msra.mxu0 %v690
        %1174 = vmatprep.subr.bf16.mxu0 %v689
        %1175 = vmatpush2.bf16.msra.mxu0 %v688
        %1176 = vmatprep.mubr.bf16.mxu0 %v1142
        %1177 = vmatmul.mubr.bf16.gmra.mxu0 %v1139
        %v1178 = vpop.f32.mrf.mxu0
        %v1179 = vadd.f32 %v539, %v1178
        %v1180 = vpop.f32.mrf.mxu0
        %v1181 = vadd.f32 %v543, %v1180
        %v1182 = vpop.f32.mrf.mxu0
        %v1183 = vpop.f32.mrf.mxu0
        %1184 = vdwg.mxu0
        %v1185 = vtanh.pop %v1179
        %v1186 = vpack.c.bf16 %v1185, %v1185
        %1188 = vrot.lane.b32.xlu0 %v1179, 96
        %v1189 = vpop.permute.xlu0 %1188
        %v1192 = vsel %vm712, %v1186, 0
        %1194 = vmatprep.subr.bf16.mxu0 0
        %1195 = vmatpush1.bf16.msra.mxu0 0
        %1196 = vmatprep.subr.bf16.mxu0 0
        %1197 = vmatpush1.bf16.msra.mxu0 0
        %1198 = vmatprep.subr.bf16.mxu0 0
        %1199 = vmatpush1.bf16.msra.mxu0 0
        %1200 = vmatprep.subr.bf16.mxu0 0
        %1201 = vmatpush1.bf16.msra.mxu0 0
        %1202 = vmatprep.subr.bf16.mxu0 0
        %1203 = vmatpush1.bf16.msra.mxu0 0
        %1204 = vmatprep.subr.bf16.mxu0 0
        %1205 = vmatpush1.bf16.msra.mxu0 0
        %1206 = vmatprep.subr.bf16.mxu0 0
        %1207 = vmatpush1.bf16.msra.mxu0 %v768
        %1208 = vmatprep.subr.bf16.mxu0 0
        %1209 = vmatpush1.bf16.msra.mxu0 %v767
        %1210 = vmatprep.subr.bf16.mxu0 0
        %1211 = vmatpush2.bf16.msra.mxu0 0
        %1212 = vmatprep.subr.bf16.mxu0 0
        %1213 = vmatpush2.bf16.msra.mxu0 0
        %1214 = vmatprep.subr.bf16.mxu0 0
        %1215 = vmatpush2.bf16.msra.mxu0 0
        %1216 = vmatprep.subr.bf16.mxu0 0
        %1217 = vmatpush2.bf16.msra.mxu0 0
        %1218 = vmatprep.subr.bf16.mxu0 0
        %1219 = vmatpush2.bf16.msra.mxu0 0
        %1220 = vmatprep.subr.bf16.mxu0 0
        %1221 = vmatpush2.bf16.msra.mxu0 0
        %1222 = vmatprep.subr.bf16.mxu0 0
        %1223 = vmatpush2.bf16.msra.mxu0 0
        %1224 = vmatprep.subr.bf16.mxu0 0
        %1225 = vmatpush2.bf16.msra.mxu0 0
        %1226 = vmatprep.mubr.bf16.mxu0 0
        %1227 = vmatmul.mubr.bf16.gmra.mxu0 %v1192
        %v1228 = vpop.f32.mrf.mxu0
        %v1229 = vadd.f32 %v1189, %v1228
        %v1230 = vpop.f32.mrf.mxu0
        %v1231 = vpop.f32.mrf.mxu0
        %v1232 = vpop.f32.mrf.mxu0
        %1233 = vdwg.mxu0
        %v1234 = vtanh.pop %v1229
        %v1235 = vpack.c.bf16 %v1234, %v1234
        %v1237 = vsel %vm712, %v1235, 0
        %1239 = vmatprep.subr.bf16.mxu0 0
        %1240 = vmatpush1.bf16.msra.mxu0 0
        %1241 = vmatprep.subr.bf16.mxu0 0
        %1242 = vmatpush1.bf16.msra.mxu0 0
        %1243 = vmatprep.subr.bf16.mxu0 0
        %1244 = vmatpush1.bf16.msra.mxu0 0
        %1245 = vmatprep.subr.bf16.mxu0 0
        %1246 = vmatpush1.bf16.msra.mxu0 0
        %1247 = vmatprep.subr.bf16.mxu0 0
        %1248 = vmatpush1.bf16.msra.mxu0 0
        %1249 = vmatprep.subr.bf16.mxu0 0
        %1250 = vmatpush1.bf16.msra.mxu0 0
        %1251 = vmatprep.subr.bf16.mxu0 0
        %1252 = vmatpush1.bf16.msra.mxu0 %v829
        %1253 = vmatprep.subr.bf16.mxu0 0
        %1254 = vmatpush1.bf16.msra.mxu0 %v828
        %1255 = vmatprep.subr.bf16.mxu0 0
        %1256 = vmatpush2.bf16.msra.mxu0 0
        %1257 = vmatprep.subr.bf16.mxu0 0
        %1258 = vmatpush2.bf16.msra.mxu0 0
        %1259 = vmatprep.subr.bf16.mxu0 0
        %1260 = vmatpush2.bf16.msra.mxu0 0
        %1261 = vmatprep.subr.bf16.mxu0 0
        %1262 = vmatpush2.bf16.msra.mxu0 0
        %1263 = vmatprep.subr.bf16.mxu0 0
        %1264 = vmatpush2.bf16.msra.mxu0 0
        %1265 = vmatprep.subr.bf16.mxu0 0
        %1266 = vmatpush2.bf16.msra.mxu0 0
        %1267 = vmatprep.subr.bf16.mxu0 0
        %1268 = vmatpush2.bf16.msra.mxu0 0
        %1269 = vmatprep.subr.bf16.mxu0 0
        %1270 = vmatpush2.bf16.msra.mxu0 0
        %1271 = vmatprep.mubr.bf16.mxu0 0
        %1272 = vmatmul.mubr.bf16.gmra.mxu0 %v1237
        %v1273 = vpop.f32.mrf.mxu0
        %v1274 = vadd.f32 %v551, %v1273
        %v1275 = vpop.f32.mrf.mxu0
        %v1276 = vpop.f32.mrf.mxu0
        %v1277 = vpop.f32.mrf.mxu0
        %1278 = vdwg.mxu0
        %1279 = vrot.lane.b32.xlu0 %v1179, 64
        %v1280 = vpop.permute.xlu0 %1279
        %v1282 = vadd.f32 %v1274, %v1280
        %v1283 = vxor.u32 %v1282, 2147483648
        %v1284 = vmul.f32 %v1283, 1.442695
        %v1285 = vpow.pop %v1284
        %v1286 = vadd.f32 %v1285, 1.0
        %v1287 = vrcp.pop %v1286
        %v1288 = vmul.f32 1.0, %v1287
        %v1289 = vmul.f32 %v1288, %v1181
        %1291 = vrot.lane.b32.xlu0 %v1289, 64
        %v1292 = vpop.permute.xlu0 %1291
        %v1294 = vadd.f32 %v1274, %v1292
        %v1295 = vtanh.pop %v1294
        %v1296 = vsub.f32 1.0, %v1288
        %1298 = vrot.lane.b32.xlu0 %v1295, 96
        %v1299 = vpop.permute.xlu0 %1298
        %v1301 = vmul.f32 %v1296, %v1299
        %1303 = vrot.lane.b32.xlu0 %v1131, 96
        %v1304 = vpop.permute.xlu0 %1303
        %v1306 = vmul.f32 %v1288, %v1304
        %v1307 = vadd.f32 %v1301, %v1306
        %1309 = vset.pattern.permute.xlu0 0
        %1310 = vperm.xlu0 %1309, %v587
        %v1311 = vpop.permute.xlu0 %1310
        %v1313 = vmul.f32 %v1311, %v1234
        %1315 = vrot.lane.b32.xlu0 %v1313, 64
        %v1316 = vpop.permute.xlu0 %1315
        %v1318 = vsub.f32 %v554, %v1316
        %1320 = vset.pattern.permute.xlu0 0
        %1321 = vperm.xlu0 %1320, %v601
        %v1322 = vpop.permute.xlu0 %1321
        %v1324 = vmul.f32 %v1318, %v1322
        %1326 = vrot.lane.b32.xlu0 %v1234, 32
        %v1327 = vpop.permute.xlu0 %1326
        %1330 = vrot.lane.b32.xlu0 %v1307, 32
        %v1331 = vpop.permute.xlu0 %1330
        %v1333 = vsel %vm712, %v1185, %v1327
        %v1334 = vsel %vm926, %v1333, %v1331
        %1335 = vrot.lane.b32.xlu0 %v554, 32
        %v1336 = vpop.permute.xlu0 %1335
        %v1338 = vsel %vm608, %v1334, %v553
        %v1339 = vpack.c.bf16 %v1338, %v1338
        %v1340 = vpack.c.bf16 %v1336, %v1336
        %v1342 = vsel %vm712, %v1340, 0
        %1344 = vmatprep.subr.bf16.mxu0 %v687
        %1345 = vmatpush1.bf16.msra.mxu0 %v686
        %1346 = vmatprep.subr.bf16.mxu0 %v685
        %1347 = vmatpush1.bf16.msra.mxu0 %v684
        %1348 = vmatprep.subr.bf16.mxu0 %v683
        %1349 = vmatpush1.bf16.msra.mxu0 %v682
        %1350 = vmatprep.subr.bf16.mxu0 %v681
        %1351 = vmatpush1.bf16.msra.mxu0 %v680
        %1352 = vmatprep.subr.bf16.mxu0 %v679
        %1353 = vmatpush1.bf16.msra.mxu0 %v678
        %1354 = vmatprep.subr.bf16.mxu0 %v677
        %1355 = vmatpush1.bf16.msra.mxu0 %v676
        %1356 = vmatprep.subr.bf16.mxu0 %v675
        %1357 = vmatpush1.bf16.msra.mxu0 %v674
        %1358 = vmatprep.subr.bf16.mxu0 %v673
        %1359 = vmatpush1.bf16.msra.mxu0 %v672
        %1360 = vmatprep.subr.bf16.mxu0 0
        %1361 = vmatpush2.bf16.msra.mxu0 0
        %1362 = vmatprep.subr.bf16.mxu0 0
        %1363 = vmatpush2.bf16.msra.mxu0 0
        %1364 = vmatprep.subr.bf16.mxu0 0
        %1365 = vmatpush2.bf16.msra.mxu0 0
        %1366 = vmatprep.subr.bf16.mxu0 0
        %1367 = vmatpush2.bf16.msra.mxu0 0
        %1368 = vmatprep.subr.bf16.mxu0 0
        %1369 = vmatpush2.bf16.msra.mxu0 0
        %1370 = vmatprep.subr.bf16.mxu0 0
        %1371 = vmatpush2.bf16.msra.mxu0 0
        %1372 = vmatprep.subr.bf16.mxu0 %v691
        %1373 = vmatpush2.bf16.msra.mxu0 %v690
        %1374 = vmatprep.subr.bf16.mxu0 %v689
        %1375 = vmatpush2.bf16.msra.mxu0 %v688
        %1376 = vmatprep.mubr.bf16.mxu0 %v1342
        %1377 = vmatmul.mubr.bf16.gmra.mxu0 %v1339
        %v1378 = vpop.f32.mrf.mxu0
        %v1379 = vadd.f32 %v539, %v1378
        %v1380 = vpop.f32.mrf.mxu0
        %v1381 = vadd.f32 %v543, %v1380
        %v1382 = vpop.f32.mrf.mxu0
        %v1383 = vpop.f32.mrf.mxu0
        %1384 = vdwg.mxu0
        %v1385 = vtanh.pop %v1379
        %v1386 = vpack.c.bf16 %v1385, %v1385
        %1388 = vrot.lane.b32.xlu0 %v1379, 96
        %v1389 = vpop.permute.xlu0 %1388
        %v1392 = vsel %vm712, %v1386, 0
        %1394 = vmatprep.subr.bf16.mxu0 0
        %1395 = vmatpush1.bf16.msra.mxu0 0
        %1396 = vmatprep.subr.bf16.mxu0 0
        %1397 = vmatpush1.bf16.msra.mxu0 0
        %1398 = vmatprep.subr.bf16.mxu0 0
        %1399 = vmatpush1.bf16.msra.mxu0 0
        %1400 = vmatprep.subr.bf16.mxu0 0
        %1401 = vmatpush1.bf16.msra.mxu0 0
        %1402 = vmatprep.subr.bf16.mxu0 0
        %1403 = vmatpush1.bf16.msra.mxu0 0
        %1404 = vmatprep.subr.bf16.mxu0 0
        %1405 = vmatpush1.bf16.msra.mxu0 0
        %1406 = vmatprep.subr.bf16.mxu0 0
        %1407 = vmatpush1.bf16.msra.mxu0 %v768
        %1408 = vmatprep.subr.bf16.mxu0 0
        %1409 = vmatpush1.bf16.msra.mxu0 %v767
        %1410 = vmatprep.subr.bf16.mxu0 0
        %1411 = vmatpush2.bf16.msra.mxu0 0
        %1412 = vmatprep.subr.bf16.mxu0 0
        %1413 = vmatpush2.bf16.msra.mxu0 0
        %1414 = vmatprep.subr.bf16.mxu0 0
        %1415 = vmatpush2.bf16.msra.mxu0 0
        %1416 = vmatprep.subr.bf16.mxu0 0
        %1417 = vmatpush2.bf16.msra.mxu0 0
        %1418 = vmatprep.subr.bf16.mxu0 0
        %1419 = vmatpush2.bf16.msra.mxu0 0
        %1420 = vmatprep.subr.bf16.mxu0 0
        %1421 = vmatpush2.bf16.msra.mxu0 0
        %1422 = vmatprep.subr.bf16.mxu0 0
        %1423 = vmatpush2.bf16.msra.mxu0 0
        %1424 = vmatprep.subr.bf16.mxu0 0
        %1425 = vmatpush2.bf16.msra.mxu0 0
        %1426 = vmatprep.mubr.bf16.mxu0 0
        %1427 = vmatmul.mubr.bf16.gmra.mxu0 %v1392
        %v1428 = vpop.f32.mrf.mxu0
        %v1429 = vadd.f32 %v1389, %v1428
        %v1430 = vpop.f32.mrf.mxu0
        %v1431 = vpop.f32.mrf.mxu0
        %v1432 = vpop.f32.mrf.mxu0
        %1433 = vdwg.mxu0
        %v1434 = vtanh.pop %v1429
        %v1435 = vpack.c.bf16 %v1434, %v1434
        %v1437 = vsel %vm712, %v1435, 0
        %1439 = vmatprep.subr.bf16.mxu0 0
        %1440 = vmatpush1.bf16.msra.mxu0 0
        %1441 = vmatprep.subr.bf16.mxu0 0
        %1442 = vmatpush1.bf16.msra.mxu0 0
        %1443 = vmatprep.subr.bf16.mxu0 0
        %1444 = vmatpush1.bf16.msra.mxu0 0
        %1445 = vmatprep.subr.bf16.mxu0 0
        %1446 = vmatpush1.bf16.msra.mxu0 0
        %1447 = vmatprep.subr.bf16.mxu0 0
        %1448 = vmatpush1.bf16.msra.mxu0 0
        %1449 = vmatprep.subr.bf16.mxu0 0
        %1450 = vmatpush1.bf16.msra.mxu0 0
        %1451 = vmatprep.subr.bf16.mxu0 0
        %1452 = vmatpush1.bf16.msra.mxu0 %v829
        %1453 = vmatprep.subr.bf16.mxu0 0
        %1454 = vmatpush1.bf16.msra.mxu0 %v828
        %1455 = vmatprep.subr.bf16.mxu0 0
        %1456 = vmatpush2.bf16.msra.mxu0 0
        %1457 = vmatprep.subr.bf16.mxu0 0
        %1458 = vmatpush2.bf16.msra.mxu0 0
        %1459 = vmatprep.subr.bf16.mxu0 0
        %1460 = vmatpush2.bf16.msra.mxu0 0
        %1461 = vmatprep.subr.bf16.mxu0 0
        %1462 = vmatpush2.bf16.msra.mxu0 0
        %1463 = vmatprep.subr.bf16.mxu0 0
        %1464 = vmatpush2.bf16.msra.mxu0 0
        %1465 = vmatprep.subr.bf16.mxu0 0
        %1466 = vmatpush2.bf16.msra.mxu0 0
        %1467 = vmatprep.subr.bf16.mxu0 0
        %1468 = vmatpush2.bf16.msra.mxu0 0
        %1469 = vmatprep.subr.bf16.mxu0 0
        %1470 = vmatpush2.bf16.msra.mxu0 0
        %1471 = vmatprep.mubr.bf16.mxu0 0
        %1472 = vmatmul.mubr.bf16.gmra.mxu0 %v1437
        %v1473 = vpop.f32.mrf.mxu0
        %v1474 = vadd.f32 %v551, %v1473
        %v1475 = vpop.f32.mrf.mxu0
        %v1476 = vpop.f32.mrf.mxu0
        %v1477 = vpop.f32.mrf.mxu0
        %1478 = vdwg.mxu0
        %1479 = vrot.lane.b32.xlu0 %v1379, 64
        %v1480 = vpop.permute.xlu0 %1479
        %v1482 = vadd.f32 %v1474, %v1480
        %v1483 = vxor.u32 %v1482, 2147483648
        %v1484 = vmul.f32 %v1483, 1.442695
        %v1485 = vpow.pop %v1484
        %v1486 = vadd.f32 %v1485, 1.0
        %v1487 = vrcp.pop %v1486
        %v1488 = vmul.f32 1.0, %v1487
        %v1489 = vmul.f32 %v1488, %v1381
        %1491 = vrot.lane.b32.xlu0 %v1489, 64
        %v1492 = vpop.permute.xlu0 %1491
        %v1494 = vadd.f32 %v1474, %v1492
        %v1495 = vtanh.pop %v1494
        %v1496 = vsub.f32 1.0, %v1488
        %1498 = vrot.lane.b32.xlu0 %v1495, 96
        %v1499 = vpop.permute.xlu0 %1498
        %v1501 = vmul.f32 %v1496, %v1499
        %1503 = vrot.lane.b32.xlu0 %v1334, 96
        %v1504 = vpop.permute.xlu0 %1503
        %v1506 = vmul.f32 %v1488, %v1504
        %v1507 = vadd.f32 %v1501, %v1506
        %1509 = vset.pattern.permute.xlu0 0
        %1510 = vperm.xlu0 %1509, %v594
        %v1511 = vpop.permute.xlu0 %1510
        %v1513 = vmul.f32 %v1511, %v1434
        %1515 = vrot.lane.b32.xlu0 %v1513, 96
        %v1516 = vpop.permute.xlu0 %1515
        %v1518 = vsub.f32 %v554, %v1516
        %1520 = vset.pattern.permute.xlu0 0
        %1521 = vperm.xlu0 %1520, %v602
        %v1522 = vpop.permute.xlu0 %1521
        %v1524 = vmul.f32 %v1518, %v1522
        %1526 = vrot.lane.b32.xlu0 %v1434, 32
        %v1527 = vpop.permute.xlu0 %1526
        %1530 = vrot.lane.b32.xlu0 %v1507, 32
        %v1531 = vpop.permute.xlu0 %1530
        %v1533 = vsel %vm712, %v1385, %v1527
        %v1534 = vsel %vm926, %v1533, %v1531
        %vm1535 = vcmask 779264
        %1536 = vst.msk [vmem:[#allocation2] sm:$0x3] %vm1535, %v1534
        %1537 = vrot.lane.b32.xlu0 %v1234, 64
        %v1538 = vpop.permute.xlu0 %1537
        %1540 = vrot.lane.b32.xlu0 %v1434, 96
        %v1541 = vpop.permute.xlu0 %1540
        %v1543 = vsel %vm712, %v818, %v1124
        %v1544 = vsel %vm926, %v1543, %v1538
        %v1545 = vsel %vm608, %v1544, %v1541
        %1546 = vst [vmem:[%s466] sm:$0x3] %v1545
        %1547 = vrot.lane.b32.xlu0 %v903, 96
        %v1548 = vpop.permute.xlu0 %1547
        %1550 = vrot.lane.b32.xlu0 %v1507, 64
        %v1551 = vpop.permute.xlu0 %1550
        %v1553 = vsel %vm712, %v1548, %v1104
        %v1554 = vsel %vm926, %v1553, %v1331
        %v1555 = vsel %vm608, %v1554, %v1551
        %1556 = vst [vmem:[%s473] sm:$0x3] %v1555
        %v1557 = vsel %vm712, %v916, %v1121
        %v1558 = vsel %vm926, %v1557, %v1324
        %v1559 = vsel %vm608, %v1558, %v1524
        %1560 = vst [vmem:[%s459] sm:$0x3] %v1559
        %s1561 = sand.u32 %s241, 1
        %s1562 = scalar_lea.sflag [#allocation5], %s1561
        %s1563 = sand.u32 %s241, 1
        %s1564 = smul.addr %s1563, 2
        %s1565 = scalar_lea.vmem [#allocation8], %s1564
        %s1566 = sand.u32 %s30, 1
        %s1567 = scalar_lea.sflag [#allocation10], %s1566
        %s1568 = sand.u32 %s269, 1
        %s1569 = smul.addr %s1568, 2
        %s1570 = scalar_lea.vmem [#allocation9], %s1569
        %s1571 = sand.u32 %s30, 1
        %s1572 = scalar_lea.sflag [#allocation10], %s1571
        %s1573 = sand.u32 %s297, 1
        %s1574 = smul.addr %s1573, 2
        %s1575 = scalar_lea.vmem [#allocation11], %s1574
        // Predicated region
        $region65: #{tpu_custom_call.1} parent=51 // pred_check
          %p1576 = pneg %p251
        $region66: #{tpu_custom_call.1} parent=51 // pred_check_branch
          %1578 = sbr.rel (%p1576) target = $region68
        $region67: #{tpu_custom_call.1} parent=51 // pred_region
          %s1580 = ssub.s32 32, 32
          %1581 = vsyncadd %s1562, %s1580
          %s1582 = smul.addr %s34, 2
          %s1583 = sadd.s32 %s35, %s1582
          %s1584 = smul.addr %s1583, 32
          %s1585 = scalar_lea.hbm %s8, %s1584
          %s1587 = sshll.u32 %s1565, 4
          %s1588 = int_to_ptr.vmem [resolvable:$true] %s1587
          %1590 = dma.vmem_to_hbm [thread:$0]  %s1588, 32, %s1585, %s1562
        $region68: #{tpu_custom_call.1} parent=51 // pred_fallthru
          _
        // Predicated region
        $region69: #{tpu_custom_call.1} parent=51 // pred_check
          %p1591 = pneg %p279
        $region70: #{tpu_custom_call.1} parent=51 // pred_check_branch
          %1593 = sbr.rel (%p1591) target = $region72
        $region71: #{tpu_custom_call.1} parent=51 // pred_region
          %s1595 = ssub.s32 32, 32
          %1596 = vsyncadd %s1567, %s1595
          %s1597 = smul.addr %s34, 2
          %s1598 = sadd.s32 %s35, %s1597
          %s1599 = smul.addr %s1598, 32
          %s1600 = scalar_lea.hbm %s9, %s1599
          %s1602 = sshll.u32 %s1570, 4
          %s1603 = int_to_ptr.vmem [resolvable:$true] %s1602
          %1605 = dma.vmem_to_hbm [thread:$0]  %s1603, 32, %s1600, %s1567
        $region72: #{tpu_custom_call.1} parent=51 // pred_fallthru
          _
        // Predicated region
        $region73: #{tpu_custom_call.1} parent=51 // pred_check
          %p1606 = pneg %p307
        $region74: #{tpu_custom_call.1} parent=51 // pred_check_branch
          %1608 = sbr.rel (%p1606) target = $region76
        $region75: #{tpu_custom_call.1} parent=51 // pred_region
          %s1610 = ssub.s32 32, 32
          %1611 = vsyncadd %s1572, %s1610
          %s1612 = smul.addr %s34, 2
          %s1613 = sadd.s32 %s35, %s1612
          %s1614 = smul.addr %s1613, 32
          %s1615 = scalar_lea.hbm %s10, %s1614
          %s1617 = sshll.u32 %s1575, 4
          %s1618 = int_to_ptr.vmem [resolvable:$true] %s1617
          %1620 = dma.vmem_to_hbm [thread:$0]  %s1618, 32, %s1615, %s1572
        $region76: #{tpu_custom_call.1} parent=51 // pred_fallthru
          _
      $region52: #{tpu_custom_call.1} parent=5 // pred_fallthru
        _
      %p1621 = scmp.le.s32.totalorder 2, %s25
      // Predicated region
      $region77: #{tpu_custom_call.1} parent=5 // pred_check
        %p1622 = pneg %p1621
      $region78: #{tpu_custom_call.1} parent=5 // pred_check_branch
        %1624 = sbr.rel (%p1622) target = $region80
      $region79: #{tpu_custom_call.1} parent=5 // pred_region
        %s1625 = ssub.s32 %s25, 2
        // Predicated region
        $region81: #{tpu_custom_call.1} parent=79 // pred_check
          %p1626 = pneg %p257
        $region82: #{tpu_custom_call.1} parent=79 // pred_check_branch
          %1628 = sbr.rel (%p1626) target = $region84
        $region83: #{tpu_custom_call.1} parent=79 // pred_region
          %s1629 = sand.u32 %s242, 1
          %s1630 = scalar_lea.sflag [#allocation5], %s1629
          %s1631 = sand.u32 %s242, 1
          %s1632 = smul.addr %s1631, 2
          %s1633 = scalar_lea.vmem [#allocation8], %s1632
          %1634 = dma.done %s1630, 32
        $region84: #{tpu_custom_call.1} parent=79 // pred_fallthru
          _
        // Predicated region
        $region85: #{tpu_custom_call.1} parent=79 // pred_check
          %p1635 = pneg %p285
        $region86: #{tpu_custom_call.1} parent=79 // pred_check_branch
          %1637 = sbr.rel (%p1635) target = $region88
        $region87: #{tpu_custom_call.1} parent=79 // pred_region
          %s1638 = sand.u32 %s31, 1
          %s1639 = scalar_lea.sflag [#allocation10], %s1638
          %s1640 = sand.u32 %s270, 1
          %s1641 = smul.addr %s1640, 2
          %s1642 = scalar_lea.vmem [#allocation9], %s1641
          %1643 = dma.done %s1639, 32
        $region88: #{tpu_custom_call.1} parent=79 // pred_fallthru
          _
        // Predicated region
        $region89: #{tpu_custom_call.1} parent=79 // pred_check
          %p1644 = pneg %p313
        $region90: #{tpu_custom_call.1} parent=79 // pred_check_branch
          %1646 = sbr.rel (%p1644) target = $region92
        $region91: #{tpu_custom_call.1} parent=79 // pred_region
          %s1647 = sand.u32 %s31, 1
          %s1648 = scalar_lea.sflag [#allocation10], %s1647
          %s1649 = sand.u32 %s298, 1
          %s1650 = smul.addr %s1649, 2
          %s1651 = scalar_lea.vmem [#allocation11], %s1650
          %1652 = dma.done %s1648, 32
        $region92: #{tpu_custom_call.1} parent=79 // pred_fallthru
          _
      $region80: #{tpu_custom_call.1} parent=5 // pred_fallthru
        _
    $region6: #{tpu_custom_call.1} parent=1 // loop_footer
      %s29 = sadd.s32 1, %s25
    $region7: #{tpu_custom_call.1} parent=1 // loop_footer_branch
      %24 = sbr.rel target = $region3
    $region8: #{tpu_custom_call.1} parent=1 // loop_exit
      _
    %1653 = vsyncpa [#allocation4], 1
    %s1654 = scalar_lea.sflag [#allocation4], 1
    %1655 = vsyncpa %s1654, 1
    %1656 = vsyncpa [#allocation7], 1
    %1657 = vsyncpa [#allocation5], 1
    %s1658 = scalar_lea.sflag [#allocation5], 1
    %1659 = vsyncpa %s1658, 1
    %1660 = vsyncpa [#allocation10], 1
    %s1661 = scalar_lea.sflag [#allocation10], 1
    %1662 = vsyncpa %s1661, 1

</llo_original>
